<compile_context>
chip_gen: v5e
topology: v5e:2x2
jax: 0.10.0
libtpu: 0.0.40
codegen_flags: <defaults>
</compile_context>

<pallas_src>
import jax
import jax.numpy as jnp
from jax import lax
from jax.experimental import pallas as pl
from jax.experimental.pallas import tpu as pltpu

N_EMB = 256
NUM_HEADS = 4
HEAD_SIZE = N_EMB // NUM_HEADS   # 64
BLOCK_SIZE = 64                  # sequence length / causal mask size
BATCH = 2


def multi_head_attention(x, wk, wq, wv, wp, bp):
    """x: (B, T, C). wk/wq/wv: (H, C, hs) (pre-transposed Linear weights).
    wp: (C, C) torch-Linear layout (out, in). bp: (C,)."""
    B, T, C = x.shape
    H, _, hs = wk.shape
    assert H * hs == C

    # Stack all per-head q/k/v projection weights into one (C, 3*C) matrix:
    # columns are [q_h0..q_h{H-1} | k_h0.. | v_h0..], each head hs wide.
    def heads_to_cols(w):               # (H, C, hs) -> (C, H*hs)
        return jnp.transpose(w, (1, 0, 2)).reshape(C, H * hs)

    w_qkv = jnp.concatenate(
        [heads_to_cols(wq), heads_to_cols(wk), heads_to_cols(wv)], axis=1)  # (C, 3C)
    wp_t = wp.T                          # (in = H*hs, out = C)
    bp2d = bp.reshape(1, C)

    def kernel(x_ref, wqkv_ref, wpt_ref, b_ref, out_ref):
        xb = x_ref[0]                    # (T, C)
        w_all = wqkv_ref[...]            # (C, 3C), resident
        wpt = wpt_ref[...]               # (H*hs, C), resident
        bias = b_ref[...]                # (1, C)

        # One MXU pass for q/k/v of every head: (T, C) @ (C, 3C) -> (T, 3C).
        qkv = jnp.dot(xb, w_all, preferred_element_type=jnp.float32)
        q_all = qkv[:, 0:C]              # (T, H*hs), vreg-aligned splits
        k_all = qkv[:, C:2 * C]
        v_all = qkv[:, 2 * C:3 * C]

        # Causal mask (lower-triangular; diagonal kept, so no fully -inf rows).
        row = lax.broadcasted_iota(jnp.int32, (T, T), 0)
        col = lax.broadcasted_iota(jnp.int32, (T, T), 1)
        causal = col <= row

        y = jnp.zeros((T, C), jnp.float32)
        for h in range(H):               # unrolled, H = 4
            sl = slice(h * hs, (h + 1) * hs)
            qh = q_all[:, sl]            # (T, hs)
            kh = k_all[:, sl]
            vh = v_all[:, sl]

            # wei = q @ k^T (NO 1/sqrt(hs) scaling, per reference module);
            # contract last dims directly instead of materializing k.T.
            wei = lax.dot_general(qh, kh, (((1,), (1,)), ((), ())),
                                  preferred_element_type=jnp.float32)   # (T, T)
            wei = jnp.where(causal, wei, -jnp.inf)

            m = jnp.max(wei, axis=-1, keepdims=True)
            e = jnp.exp(wei - m)
            s = jnp.sum(e, axis=-1, keepdims=True)
            p = e * pl.reciprocal(s, approx=True)                       # softmax(dim=-1)

            oh = jnp.dot(p, vh, preferred_element_type=jnp.float32)     # (T, hs)

            # Fused head-concat + output projection:
            # cat(...)[:, h*hs:(h+1)*hs] @ Wp^T[h*hs:(h+1)*hs, :]
            y = y + jnp.dot(oh, wpt[sl, :], preferred_element_type=jnp.float32)

        y = y + bias                                                    # broadcast (1, C)
        out_ref[0] = y.astype(out_ref.dtype)                            # lane-dense (T, C)

    return pl.pallas_call(
        kernel,
        out_shape=jax.ShapeDtypeStruct((B, T, C), x.dtype),
        grid=(B,),
        in_specs=[
            pl.BlockSpec((1, T, C), lambda b: (b, 0, 0)),      # per-batch x tile
            pl.BlockSpec((C, 3 * C), lambda b: (0, 0)),        # resident stacked QKV weight
            pl.BlockSpec((C, C), lambda b: (0, 0)),            # resident proj weight (in, out)
            pl.BlockSpec((1, C), lambda b: (0, 0)),            # resident proj bias
        ],
        out_specs=pl.BlockSpec((1, T, C), lambda b: (b, 0, 0)),
        compiler_params=pltpu.CompilerParams(
            dimension_semantics=("parallel",)),
    )(x, w_qkv, wp_t, bp2d)


def reference(x, wk, wq, wv, wp, bp):
    """Pure-JAX mirror of the PyTorch forward (dropout in eval mode)."""
    B, T, C = x.shape
    k = jnp.einsum('btc,hcd->bhtd', x, wk)
    q = jnp.einsum('btc,hcd->bhtd', x, wq)
    v = jnp.einsum('btc,hcd->bhtd', x, wv)
    wei = jnp.einsum('bhtd,bhsd->bhts', q, k)
    mask = jnp.tril(jnp.ones((T, T), dtype=bool))
    wei = jnp.where(mask, wei, -jnp.inf)
    wei = jax.nn.softmax(wei, axis=-1)
    o = jnp.einsum('bhts,bhsd->bhtd', wei, v)
    cat = jnp.transpose(o, (0, 2, 1, 3)).reshape(B, T, -1)
    return cat @ wp.T + bp


if __name__ == "__main__":
    key = jax.random.PRNGKey(0)
    kx, kk, kq, kv, kp, kb = jax.random.split(key, 6)

    x = jax.random.normal(kx, (BATCH, BLOCK_SIZE, N_EMB), dtype=jnp.float32)

    # Deterministic synthetic parameters (shapes follow nn.Linear in the module).
    wk = 0.1 * jax.random.normal(kk, (NUM_HEADS, N_EMB, HEAD_SIZE), dtype=jnp.float32)
    wq = 0.1 * jax.random.normal(kq, (NUM_HEADS, N_EMB, HEAD_SIZE), dtype=jnp.float32)
    wv = 0.1 * jax.random.normal(kv, (NUM_HEADS, N_EMB, HEAD_SIZE), dtype=jnp.float32)
    wp = 0.1 * jax.random.normal(kp, (N_EMB, N_EMB), dtype=jnp.float32)   # (out, in)
    bp = 0.1 * jax.random.normal(kb, (N_EMB,), dtype=jnp.float32)

    out = multi_head_attention(x, wk, wq, wv, wp, bp)
    out = jax.block_until_ready(out)

    ref = reference(x, wk, wq, wv, wp, bp)
    assert out.shape == (BATCH, BLOCK_SIZE, N_EMB)
    # pl.reciprocal(approx=True) introduces a small (~1e-3) relative error in the
    # softmax normalization; tolerance is sized accordingly.
    assert jnp.allclose(out, ref, atol=2e-2, rtol=2e-2), "mismatch vs pure-JAX reference"

    print("KERNEL_OK")
</pallas_src>

<mosaic_0001>
module attributes {stable_mosaic.version = 11 : i64} {
  func.func @kernel(%arg0: i32, %arg1: memref<1x64x256xf32, #tpu.memory_space<vmem>>, %arg2: memref<256x768xf32, #tpu.memory_space<vmem>>, %arg3: memref<256x256xf32, #tpu.memory_space<vmem>>, %arg4: memref<1x256xf32, #tpu.memory_space<vmem>>, %arg5: memref<1x64x256xf32, #tpu.memory_space<vmem>>) attributes {dimension_semantics = [#tpu.dimension_semantics<parallel>], iteration_bounds = array<i64: 2>, scalar_prefetch = 0 : i64, scratch_operands = 0 : i64, tpu.core_type = #tpu.core_type<tc>, window_params = [{transform_indices = @transform_0, window_bounds = array<i64: 1, 64, 256>}, {pipeline_mode = #tpu.pipeline_mode<synchronous>, transform_indices = @transform_1, window_bounds = array<i64: 256, 768>}, {pipeline_mode = #tpu.pipeline_mode<synchronous>, transform_indices = @transform_2, window_bounds = array<i64: 256, 256>}, {pipeline_mode = #tpu.pipeline_mode<synchronous>, transform_indices = @transform_3, window_bounds = array<i64: 1, 256>}, {transform_indices = @transform_4, window_bounds = array<i64: 1, 64, 256>}]} {
    %c0 = arith.constant 0 : index
    %c0_0 = arith.constant 0 : index
    %c0_1 = arith.constant 0 : index
    %0 = vector.load %arg1[%c0, %c0_0, %c0_1] : memref<1x64x256xf32, #tpu.memory_space<vmem>>, vector<1x64x256xf32>
    %1 = vector.shape_cast %0 : vector<1x64x256xf32> to vector<64x256xf32>
    %c0_2 = arith.constant 0 : index
    %c0_3 = arith.constant 0 : index
    %2 = vector.load %arg2[%c0_2, %c0_3] : memref<256x768xf32, #tpu.memory_space<vmem>>, vector<256x768xf32>
    %c0_4 = arith.constant 0 : index
    %c0_5 = arith.constant 0 : index
    %3 = vector.load %arg3[%c0_4, %c0_5] : memref<256x256xf32, #tpu.memory_space<vmem>>, vector<256x256xf32>
    %c0_6 = arith.constant 0 : index
    %c0_7 = arith.constant 0 : index
    %4 = vector.load %arg4[%c0_6, %c0_7] : memref<1x256xf32, #tpu.memory_space<vmem>>, vector<1x256xf32>
    %cst = arith.constant dense<0.000000e+00> : vector<64x768xf32>
    %5 = tpu.matmul %1, %2, %cst {dimension_numbers = #tpu.dot_dimension_numbers<[1], [0], [0], [1], [0, 0, 1, 1], [], []>} : vector<64x256xf32>, vector<256x768xf32>, vector<64x768xf32> -> vector<64x768xf32>
    %6 = vector.extract_strided_slice %5 {offsets = [0, 0], sizes = [64, 256], strides = [1, 1]} : vector<64x768xf32> to vector<64x256xf32>
    %7 = vector.extract_strided_slice %5 {offsets = [0, 256], sizes = [64, 256], strides = [1, 1]} : vector<64x768xf32> to vector<64x256xf32>
    %8 = vector.extract_strided_slice %5 {offsets = [0, 512], sizes = [64, 256], strides = [1, 1]} : vector<64x768xf32> to vector<64x256xf32>
    %9 = tpu.iota {dimensions = array<i32: 0>} : vector<64x64xi32>
    %10 = tpu.iota {dimensions = array<i32: 1>} : vector<64x64xi32>
    %11 = arith.cmpi sle, %10, %9 : vector<64x64xi32>
    %cst_8 = arith.constant 0.000000e+00 : f32
    %12 = vector.broadcast %cst_8 : f32 to vector<64x256xf32>
    %13 = vector.extract_strided_slice %6 {offsets = [0, 0], sizes = [64, 64], strides = [1, 1]} : vector<64x256xf32> to vector<64x64xf32>
    %14 = vector.extract_strided_slice %7 {offsets = [0, 0], sizes = [64, 64], strides = [1, 1]} : vector<64x256xf32> to vector<64x64xf32>
    %15 = vector.extract_strided_slice %8 {offsets = [0, 0], sizes = [64, 64], strides = [1, 1]} : vector<64x256xf32> to vector<64x64xf32>
    %cst_9 = arith.constant dense<0.000000e+00> : vector<64x64xf32>
    %16 = tpu.matmul %13, %14, %cst_9 {dimension_numbers = #tpu.dot_dimension_numbers<[1], [1], [0], [0], [0, 0, 1, 0], [], []>} : vector<64x64xf32>, vector<64x64xf32>, vector<64x64xf32> -> vector<64x64xf32>
    %cst_10 = arith.constant 0xFF800000 : f32
    %17 = vector.broadcast %cst_10 : f32 to vector<64x64xf32>
    %18 = arith.select %11, %16, %17 : vector<64x64xi1>, vector<64x64xf32>
    %cst_11 = arith.constant dense<0xFF800000> : vector<64xf32>
    %19 = vector.multi_reduction <maximumf>, %18, %cst_11 [1] : vector<64x64xf32> to vector<64xf32>
    %20 = vector.shape_cast %19 : vector<64xf32> to vector<64x1xf32>
    %21 = vector.broadcast %20 : vector<64x1xf32> to vector<64x64xf32>
    %22 = arith.subf %18, %21 : vector<64x64xf32>
    %23 = math.exp %22 : vector<64x64xf32>
    %cst_12 = arith.constant dense<0.000000e+00> : vector<64xf32>
    %24 = vector.multi_reduction <add>, %23, %cst_12 [1] : vector<64x64xf32> to vector<64xf32>
    %25 = vector.shape_cast %24 : vector<64xf32> to vector<64x1xf32>
    %26 = tpu.reciprocal %25 {approx = true} : vector<64x1xf32> -> vector<64x1xf32>
    %27 = vector.broadcast %26 : vector<64x1xf32> to vector<64x64xf32>
    %28 = arith.mulf %23, %27 : vector<64x64xf32>
    %cst_13 = arith.constant dense<0.000000e+00> : vector<64x64xf32>
    %29 = tpu.matmul %28, %15, %cst_13 {dimension_numbers = #tpu.dot_dimension_numbers<[1], [0], [0], [1], [0, 0, 1, 1], [], []>} : vector<64x64xf32>, vector<64x64xf32>, vector<64x64xf32> -> vector<64x64xf32>
    %30 = vector.extract_strided_slice %3 {offsets = [0, 0], sizes = [64, 256], strides = [1, 1]} : vector<256x256xf32> to vector<64x256xf32>
    %cst_14 = arith.constant dense<0.000000e+00> : vector<64x256xf32>
    %31 = tpu.matmul %29, %30, %cst_14 {dimension_numbers = #tpu.dot_dimension_numbers<[1], [0], [0], [1], [0, 0, 1, 1], [], []>} : vector<64x64xf32>, vector<64x256xf32>, vector<64x256xf32> -> vector<64x256xf32>
    %32 = arith.addf %12, %31 : vector<64x256xf32>
    %33 = vector.extract_strided_slice %6 {offsets = [0, 64], sizes = [64, 64], strides = [1, 1]} : vector<64x256xf32> to vector<64x64xf32>
    %34 = vector.extract_strided_slice %7 {offsets = [0, 64], sizes = [64, 64], strides = [1, 1]} : vector<64x256xf32> to vector<64x64xf32>
    %35 = vector.extract_strided_slice %8 {offsets = [0, 64], sizes = [64, 64], strides = [1, 1]} : vector<64x256xf32> to vector<64x64xf32>
    %cst_15 = arith.constant dense<0.000000e+00> : vector<64x64xf32>
    %36 = tpu.matmul %33, %34, %cst_15 {dimension_numbers = #tpu.dot_dimension_numbers<[1], [1], [0], [0], [0, 0, 1, 0], [], []>} : vector<64x64xf32>, vector<64x64xf32>, vector<64x64xf32> -> vector<64x64xf32>
    %cst_16 = arith.constant 0xFF800000 : f32
    %37 = vector.broadcast %cst_16 : f32 to vector<64x64xf32>
    %38 = arith.select %11, %36, %37 : vector<64x64xi1>, vector<64x64xf32>
    %cst_17 = arith.constant dense<0xFF800000> : vector<64xf32>
    %39 = vector.multi_reduction <maximumf>, %38, %cst_17 [1] : vector<64x64xf32> to vector<64xf32>
    %40 = vector.shape_cast %39 : vector<64xf32> to vector<64x1xf32>
    %41 = vector.broadcast %40 : vector<64x1xf32> to vector<64x64xf32>
    %42 = arith.subf %38, %41 : vector<64x64xf32>
    %43 = math.exp %42 : vector<64x64xf32>
    %cst_18 = arith.constant dense<0.000000e+00> : vector<64xf32>
    %44 = vector.multi_reduction <add>, %43, %cst_18 [1] : vector<64x64xf32> to vector<64xf32>
    %45 = vector.shape_cast %44 : vector<64xf32> to vector<64x1xf32>
    %46 = tpu.reciprocal %45 {approx = true} : vector<64x1xf32> -> vector<64x1xf32>
    %47 = vector.broadcast %46 : vector<64x1xf32> to vector<64x64xf32>
    %48 = arith.mulf %43, %47 : vector<64x64xf32>
    %cst_19 = arith.constant dense<0.000000e+00> : vector<64x64xf32>
    %49 = tpu.matmul %48, %35, %cst_19 {dimension_numbers = #tpu.dot_dimension_numbers<[1], [0], [0], [1], [0, 0, 1, 1], [], []>} : vector<64x64xf32>, vector<64x64xf32>, vector<64x64xf32> -> vector<64x64xf32>
    %50 = vector.extract_strided_slice %3 {offsets = [64, 0], sizes = [64, 256], strides = [1, 1]} : vector<256x256xf32> to vector<64x256xf32>
    %cst_20 = arith.constant dense<0.000000e+00> : vector<64x256xf32>
    %51 = tpu.matmul %49, %50, %cst_20 {dimension_numbers = #tpu.dot_dimension_numbers<[1], [0], [0], [1], [0, 0, 1, 1], [], []>} : vector<64x64xf32>, vector<64x256xf32>, vector<64x256xf32> -> vector<64x256xf32>
    %52 = arith.addf %32, %51 : vector<64x256xf32>
    %53 = vector.extract_strided_slice %6 {offsets = [0, 128], sizes = [64, 64], strides = [1, 1]} : vector<64x256xf32> to vector<64x64xf32>
    %54 = vector.extract_strided_slice %7 {offsets = [0, 128], sizes = [64, 64], strides = [1, 1]} : vector<64x256xf32> to vector<64x64xf32>
    %55 = vector.extract_strided_slice %8 {offsets = [0, 128], sizes = [64, 64], strides = [1, 1]} : vector<64x256xf32> to vector<64x64xf32>
    %cst_21 = arith.constant dense<0.000000e+00> : vector<64x64xf32>
    %56 = tpu.matmul %53, %54, %cst_21 {dimension_numbers = #tpu.dot_dimension_numbers<[1], [1], [0], [0], [0, 0, 1, 0], [], []>} : vector<64x64xf32>, vector<64x64xf32>, vector<64x64xf32> -> vector<64x64xf32>
    %cst_22 = arith.constant 0xFF800000 : f32
    %57 = vector.broadcast %cst_22 : f32 to vector<64x64xf32>
    %58 = arith.select %11, %56, %57 : vector<64x64xi1>, vector<64x64xf32>
    %cst_23 = arith.constant dense<0xFF800000> : vector<64xf32>
    %59 = vector.multi_reduction <maximumf>, %58, %cst_23 [1] : vector<64x64xf32> to vector<64xf32>
    %60 = vector.shape_cast %59 : vector<64xf32> to vector<64x1xf32>
    %61 = vector.broadcast %60 : vector<64x1xf32> to vector<64x64xf32>
    %62 = arith.subf %58, %61 : vector<64x64xf32>
    %63 = math.exp %62 : vector<64x64xf32>
    %cst_24 = arith.constant dense<0.000000e+00> : vector<64xf32>
    %64 = vector.multi_reduction <add>, %63, %cst_24 [1] : vector<64x64xf32> to vector<64xf32>
    %65 = vector.shape_cast %64 : vector<64xf32> to vector<64x1xf32>
    %66 = tpu.reciprocal %65 {approx = true} : vector<64x1xf32> -> vector<64x1xf32>
    %67 = vector.broadcast %66 : vector<64x1xf32> to vector<64x64xf32>
    %68 = arith.mulf %63, %67 : vector<64x64xf32>
    %cst_25 = arith.constant dense<0.000000e+00> : vector<64x64xf32>
    %69 = tpu.matmul %68, %55, %cst_25 {dimension_numbers = #tpu.dot_dimension_numbers<[1], [0], [0], [1], [0, 0, 1, 1], [], []>} : vector<64x64xf32>, vector<64x64xf32>, vector<64x64xf32> -> vector<64x64xf32>
    %70 = vector.extract_strided_slice %3 {offsets = [128, 0], sizes = [64, 256], strides = [1, 1]} : vector<256x256xf32> to vector<64x256xf32>
    %cst_26 = arith.constant dense<0.000000e+00> : vector<64x256xf32>
    %71 = tpu.matmul %69, %70, %cst_26 {dimension_numbers = #tpu.dot_dimension_numbers<[1], [0], [0], [1], [0, 0, 1, 1], [], []>} : vector<64x64xf32>, vector<64x256xf32>, vector<64x256xf32> -> vector<64x256xf32>
    %72 = arith.addf %52, %71 : vector<64x256xf32>
    %73 = vector.extract_strided_slice %6 {offsets = [0, 192], sizes = [64, 64], strides = [1, 1]} : vector<64x256xf32> to vector<64x64xf32>
    %74 = vector.extract_strided_slice %7 {offsets = [0, 192], sizes = [64, 64], strides = [1, 1]} : vector<64x256xf32> to vector<64x64xf32>
    %75 = vector.extract_strided_slice %8 {offsets = [0, 192], sizes = [64, 64], strides = [1, 1]} : vector<64x256xf32> to vector<64x64xf32>
    %cst_27 = arith.constant dense<0.000000e+00> : vector<64x64xf32>
    %76 = tpu.matmul %73, %74, %cst_27 {dimension_numbers = #tpu.dot_dimension_numbers<[1], [1], [0], [0], [0, 0, 1, 0], [], []>} : vector<64x64xf32>, vector<64x64xf32>, vector<64x64xf32> -> vector<64x64xf32>
    %cst_28 = arith.constant 0xFF800000 : f32
    %77 = vector.broadcast %cst_28 : f32 to vector<64x64xf32>
    %78 = arith.select %11, %76, %77 : vector<64x64xi1>, vector<64x64xf32>
    %cst_29 = arith.constant dense<0xFF800000> : vector<64xf32>
    %79 = vector.multi_reduction <maximumf>, %78, %cst_29 [1] : vector<64x64xf32> to vector<64xf32>
    %80 = vector.shape_cast %79 : vector<64xf32> to vector<64x1xf32>
    %81 = vector.broadcast %80 : vector<64x1xf32> to vector<64x64xf32>
    %82 = arith.subf %78, %81 : vector<64x64xf32>
    %83 = math.exp %82 : vector<64x64xf32>
    %cst_30 = arith.constant dense<0.000000e+00> : vector<64xf32>
    %84 = vector.multi_reduction <add>, %83, %cst_30 [1] : vector<64x64xf32> to vector<64xf32>
    %85 = vector.shape_cast %84 : vector<64xf32> to vector<64x1xf32>
    %86 = tpu.reciprocal %85 {approx = true} : vector<64x1xf32> -> vector<64x1xf32>
    %87 = vector.broadcast %86 : vector<64x1xf32> to vector<64x64xf32>
    %88 = arith.mulf %83, %87 : vector<64x64xf32>
    %cst_31 = arith.constant dense<0.000000e+00> : vector<64x64xf32>
    %89 = tpu.matmul %88, %75, %cst_31 {dimension_numbers = #tpu.dot_dimension_numbers<[1], [0], [0], [1], [0, 0, 1, 1], [], []>} : vector<64x64xf32>, vector<64x64xf32>, vector<64x64xf32> -> vector<64x64xf32>
    %90 = vector.extract_strided_slice %3 {offsets = [192, 0], sizes = [64, 256], strides = [1, 1]} : vector<256x256xf32> to vector<64x256xf32>
    %cst_32 = arith.constant dense<0.000000e+00> : vector<64x256xf32>
    %91 = tpu.matmul %89, %90, %cst_32 {dimension_numbers = #tpu.dot_dimension_numbers<[1], [0], [0], [1], [0, 0, 1, 1], [], []>} : vector<64x64xf32>, vector<64x256xf32>, vector<64x256xf32> -> vector<64x256xf32>
    %92 = arith.addf %72, %91 : vector<64x256xf32>
    %93 = vector.broadcast %4 : vector<1x256xf32> to vector<64x256xf32>
    %94 = arith.addf %92, %93 : vector<64x256xf32>
    %c0_33 = arith.constant 0 : index
    %c0_34 = arith.constant 0 : index
    %c0_35 = arith.constant 0 : index
    %95 = vector.load %arg5[%c0_33, %c0_34, %c0_35] : memref<1x64x256xf32, #tpu.memory_space<vmem>>, vector<1x64x256xf32>
    %96 = vector.shape_cast %95 : vector<1x64x256xf32> to vector<64x256xf32>
    %97 = vector.shape_cast %94 : vector<64x256xf32> to vector<1x64x256xf32>
    tpu.vector_store %arg5[%c0_33, %c0_34, %c0_35], %97 {strides = array<i32>} : memref<1x64x256xf32, #tpu.memory_space<vmem>>, vector<1x64x256xf32>,
    return
  }
  func.func @transform_0(%arg0: i32) -> (i32, i32, i32) {
    %c0_i32 = arith.constant 0 : i32
    %c0_i32_0 = arith.constant 0 : i32
    %c0_i32_1 = arith.constant 0 : i32
    return %arg0, %c0_i32, %c0_i32_0 : i32, i32, i32
  }
  func.func @transform_1(%arg0: i32) -> (i32, i32) {
    %c0_i32 = arith.constant 0 : i32
    %c0_i32_0 = arith.constant 0 : i32
    %c0_i32_1 = arith.constant 0 : i32
    return %c0_i32, %c0_i32_0 : i32, i32
  }
  func.func @transform_2(%arg0: i32) -> (i32, i32) {
    %c0_i32 = arith.constant 0 : i32
    %c0_i32_0 = arith.constant 0 : i32
    %c0_i32_1 = arith.constant 0 : i32
    return %c0_i32, %c0_i32_0 : i32, i32
  }
  func.func @transform_3(%arg0: i32) -> (i32, i32) {
    %c0_i32 = arith.constant 0 : i32
    %c0_i32_0 = arith.constant 0 : i32
    %c0_i32_1 = arith.constant 0 : i32
    return %c0_i32, %c0_i32_0 : i32, i32
  }
  func.func @transform_4(%arg0: i32) -> (i32, i32, i32) {
    %c0_i32 = arith.constant 0 : i32
    %c0_i32_0 = arith.constant 0 : i32
    %c0_i32_1 = arith.constant 0 : i32
    return %arg0, %c0_i32, %c0_i32_0 : i32, i32, i32
  }
}

</mosaic_0001>

<llo_original>
// kernel: tpu_custom_call.1
$region0: #{tpu_custom_call.1}
  #allocation0 [shape = 'u32[]', space=smem, size = 0x4, offset = 0x4, fixed_abs, tag = 'smem constant byte address 0x4 - core index']
  #allocation1 [shape = 'u32[72,128]{1,0:T(1,128)}', space=vmem, size = 0x9000, scoped, tag = 'internal scratch']
  %s0 = inlined_call_operand.hbm [shape: f32[2,64,256], index: 0, kind: input, shape index: {}]
  %s1 = inlined_call_operand.hbm [shape: f32[256,768], index: 1, kind: input, shape index: {}]
  %s2 = inlined_call_operand.hbm [shape: f32[256,256], index: 2, kind: input, shape index: {}]
  %s3 = inlined_call_operand.vmem [shape: f32[1,256], index: 3, kind: input, shape index: {}]
  %s4 = inlined_call_operand.hbm [shape: f32[2,64,256], index: 4, kind: output, shape index: {}]
  %s5 = sld [smem:[#allocation0]]
  $region61: #{tpu_custom_call.1} parent=0
    _
  %s7 = ssub.s32 1, %s5
  %s8 = scalar_select 0, %s7, %s5
  $region1: #{tpu_custom_call.1} parent=0
    #allocation2 [shape = 'u8[131072]{0}', space=vmem, size = 0x20000, scoped, tag = 'input window, operand 0']
    #allocation3 [shape = 's32[2]{0}', space=sflag, size = 0x8, scoped, tag = 'scoped memory for tpu_custom_call.1']
    #allocation4 [shape = 's32[2]{0}', space=sflag, size = 0x8, scoped, tag = 'scoped memory for tpu_custom_call.1']
    #allocation5 [shape = 'u8[786432]{0}', space=vmem, size = 0xc0000, scoped, tag = 'input window, operand 1, single buffered']
    #allocation6 [shape = 's32[1]{0}', space=sflag, size = 0x4, scoped, tag = 'scoped memory for tpu_custom_call.1']
    #allocation7 [shape = 'u8[262144]{0}', space=vmem, size = 0x40000, scoped, tag = 'input window, operand 2, single buffered']
    #allocation8 [shape = 'u8[131072]{0}', space=vmem, size = 0x20000, scoped, tag = 'output window, operand 0']
    %9 = vsyncpa [#allocation3], 0
    %s10 = scalar_lea.sflag [#allocation3], 1
    %11 = vsyncpa %s10, 0
    %12 = vsyncpa [#allocation6], 0
    %13 = vsyncpa [#allocation4], 0
    %s14 = scalar_lea.sflag [#allocation4], 1
    %15 = vsyncpa %s14, 0
    loop: start=0, step=1, limit=4
    $region2: #{tpu_custom_call.1} parent=1 // loop_pre_header
      _
    $region3: #{tpu_custom_call.1} parent=1 // loop_header
      %s17 = sphi 0, %s21
      %p18 = scmp.ge.s32.totalorder %s17, 4
      %s27 = sphi 0, %s29
      %s30 = sphi 0, %s27
      %s31 = sphi 0, %s30
      %s47 = sphi 0, %s31
      %s51 = sphi 0, %s51
      %s53 = sphi 0, %s51
      %s54 = sphi 0, %s53
      %s68 = sphi 0, %s54
      %s72 = sphi 0, %s72
      %s74 = sphi 0, %s72
      %s75 = sphi 0, %s74
      %s89 = sphi 0, %s75
      %s93 = sphi 0, %s93
      %s95 = sphi 0, %s93
      %s96 = sphi 0, %s95
      %s110 = sphi 0, %s96
      %s116 = sphi 0, %s118
      %s119 = sphi 0, %s116
      %s120 = sphi 0, %s119
      %s136 = sphi 0, %s120
    $region4: #{tpu_custom_call.1} parent=1 // loop_header_branch
      %20 = sbr.rel (%p18) target = $region8
    $region5: #{tpu_custom_call.1} parent=1 // loop_body
      %s22 = ssub.s32 %s17, 1
      %s23 = ssub.s32 %s17, 2
      %s24 = sadd.s32 %s17, 1
      %s25 = ssub.s32 %s17, %s24
      %p26 = scmp.eq.s32.totalorder %s25, 0
      %s28 = sadd.s32 %s27, 1
      %s29 = scalar_select %p26, %s27, %s28
      %p32 = pneg %p26
      %p33 = scmp.eq.s32.totalorder %s17, 1
      %p34 = por %p32, %p33
      %p35 = scmp.ne.s32.totalorder %s27, %s30
      %p36 = scmp.eq.s32.totalorder %s17, 0
      %p37 = por %p35, %p36
      %p38 = scmp.ne.s32.totalorder %s27, %s30
      %p39 = scmp.eq.s32.totalorder %s22, 1
      %p40 = por %p38, %p39
      %p41 = scmp.ne.s32.totalorder %s30, %s31
      %p42 = scmp.eq.s32.totalorder %s22, 0
      %p43 = por %p41, %p42
      %p44 = scmp.ne.s32.totalorder %s30, %s31
      %p45 = scmp.eq.s32.totalorder %s23, 1
      %p46 = por %p44, %p45
      %p48 = scmp.ne.s32.totalorder %s31, %s47
      %p49 = scmp.eq.s32.totalorder %s23, 0
      %p50 = por %p48, %p49
      %s52 = sadd.s32 %s51, 1
      %p55 = scmp.eq.s32.totalorder %s17, 1
      %p56 = scmp.ne.s32.totalorder %s51, %s53
      %p57 = scmp.eq.s32.totalorder %s17, 0
      %p58 = por %p56, %p57
      %p59 = scmp.ne.s32.totalorder %s51, %s53
      %p60 = scmp.eq.s32.totalorder %s22, 1
      %p61 = por %p59, %p60
      %p62 = scmp.ne.s32.totalorder %s53, %s54
      %p63 = scmp.eq.s32.totalorder %s22, 0
      %p64 = por %p62, %p63
      %p65 = scmp.ne.s32.totalorder %s53, %s54
      %p66 = scmp.eq.s32.totalorder %s23, 1
      %p67 = por %p65, %p66
      %p69 = scmp.ne.s32.totalorder %s54, %s68
      %p70 = scmp.eq.s32.totalorder %s23, 0
      %p71 = por %p69, %p70
      %s73 = sadd.s32 %s72, 1
      %p76 = scmp.eq.s32.totalorder %s17, 1
      %p77 = scmp.ne.s32.totalorder %s72, %s74
      %p78 = scmp.eq.s32.totalorder %s17, 0
      %p79 = por %p77, %p78
      %p80 = scmp.ne.s32.totalorder %s72, %s74
      %p81 = scmp.eq.s32.totalorder %s22, 1
      %p82 = por %p80, %p81
      %p83 = scmp.ne.s32.totalorder %s74, %s75
      %p84 = scmp.eq.s32.totalorder %s22, 0
      %p85 = por %p83, %p84
      %p86 = scmp.ne.s32.totalorder %s74, %s75
      %p87 = scmp.eq.s32.totalorder %s23, 1
      %p88 = por %p86, %p87
      %p90 = scmp.ne.s32.totalorder %s75, %s89
      %p91 = scmp.eq.s32.totalorder %s23, 0
      %p92 = por %p90, %p91
      %s94 = sadd.s32 %s93, 1
      %p97 = scmp.eq.s32.totalorder %s17, 1
      %p98 = scmp.ne.s32.totalorder %s93, %s95
      %p99 = scmp.eq.s32.totalorder %s17, 0
      %p100 = por %p98, %p99
      %p101 = scmp.ne.s32.totalorder %s93, %s95
      %p102 = scmp.eq.s32.totalorder %s22, 1
      %p103 = por %p101, %p102
      %p104 = scmp.ne.s32.totalorder %s95, %s96
      %p105 = scmp.eq.s32.totalorder %s22, 0
      %p106 = por %p104, %p105
      %p107 = scmp.ne.s32.totalorder %s95, %s96
      %p108 = scmp.eq.s32.totalorder %s23, 1
      %p109 = por %p107, %p108
      %p111 = scmp.ne.s32.totalorder %s96, %s110
      %p112 = scmp.eq.s32.totalorder %s23, 0
      %p113 = por %p111, %p112
      %s114 = ssub.s32 %s17, %s24
      %p115 = scmp.eq.s32.totalorder %s114, 0
      %s117 = sadd.s32 %s116, 1
      %s118 = scalar_select %p115, %s116, %s117
      %p121 = pneg %p115
      %p122 = scmp.eq.s32.totalorder %s17, 1
      %p123 = por %p121, %p122
      %p124 = scmp.ne.s32.totalorder %s116, %s119
      %p125 = scmp.eq.s32.totalorder %s17, 0
      %p126 = por %p124, %p125
      %p127 = scmp.ne.s32.totalorder %s116, %s119
      %p128 = scmp.eq.s32.totalorder %s22, 1
      %p129 = por %p127, %p128
      %p130 = scmp.ne.s32.totalorder %s119, %s120
      %p131 = scmp.eq.s32.totalorder %s22, 0
      %p132 = por %p130, %p131
      %p133 = scmp.ne.s32.totalorder %s119, %s120
      %p134 = scmp.eq.s32.totalorder %s23, 1
      %p135 = por %p133, %p134
      %p137 = scmp.ne.s32.totalorder %s120, %s136
      %p138 = scmp.eq.s32.totalorder %s23, 0
      %p139 = por %p137, %p138
      %p140 = scmp.le.s32.totalorder 1, %s17
      %p141 = scmp.lt.s32.totalorder %s17, 3
      %p142 = pnand %p140, %p141
      %p143 = pneg %p142
      // Predicated region
      $region9: #{tpu_custom_call.1} parent=5 // pred_check
        _
      $region10: #{tpu_custom_call.1} parent=5 // pred_check_branch
        %145 = sbr.rel (%p142) target = $region12
      $region11: #{tpu_custom_call.1} parent=5 // pred_region
        %s146 = ssub.s32 %s17, 1
        // Predicated region
        $region13: #{tpu_custom_call.1} parent=11 // pred_check
          %p147 = pneg %p64
        $region14: #{tpu_custom_call.1} parent=11 // pred_check_branch
          %149 = sbr.rel (%p147) target = $region16
        $region15: #{tpu_custom_call.1} parent=11 // pred_region
          %151 = vsyncadd [#allocation6], 0
          %s152 = sshll.u32 %s1, 4
          %s153 = int_to_ptr.hbm [resolvable:$true] %s152
          %s154 = sshll.u32 [#allocation5], 4
          %s155 = int_to_ptr.vmem [resolvable:$true] %s154
          %160 = dma.hbm_to_vmem [thread:$0]  %s153, 24576, %s155, [#allocation6], 768, 768, 48
        $region16: #{tpu_custom_call.1} parent=11 // pred_fallthru
          _
        // Predicated region
        $region17: #{tpu_custom_call.1} parent=11 // pred_check
          %p161 = pneg %p85
        $region18: #{tpu_custom_call.1} parent=11 // pred_check_branch
          %163 = sbr.rel (%p161) target = $region20
        $region19: #{tpu_custom_call.1} parent=11 // pred_region
          %165 = vsyncadd [#allocation6], 0
          %s166 = sshll.u32 %s2, 4
          %s167 = int_to_ptr.hbm [resolvable:$true] %s166
          %s168 = sshll.u32 [#allocation7], 4
          %s169 = int_to_ptr.vmem [resolvable:$true] %s168
          %174 = dma.hbm_to_vmem [thread:$0]  %s167, 8192, %s169, [#allocation6], 256, 256, 16
        $region20: #{tpu_custom_call.1} parent=11 // pred_fallthru
          _
        // Predicated region
        $region21: #{tpu_custom_call.1} parent=11 // pred_check
          %p175 = pneg %p106
        $region22: #{tpu_custom_call.1} parent=11 // pred_check_branch
          %177 = sbr.rel (%p175) target = $region24
        $region23: #{tpu_custom_call.1} parent=11 // pred_region
          _
        $region24: #{tpu_custom_call.1} parent=11 // pred_fallthru
          _
      $region12: #{tpu_custom_call.1} parent=5 // pred_fallthru
        _
      %p178 = scmp.lt.s32.totalorder %s17, 2
      // Predicated region
      $region25: #{tpu_custom_call.1} parent=5 // pred_check
        %p179 = pneg %p178
      $region26: #{tpu_custom_call.1} parent=5 // pred_check_branch
        %181 = sbr.rel (%p179) target = $region28
      $region27: #{tpu_custom_call.1} parent=5 // pred_region
        // Predicated region
        $region29: #{tpu_custom_call.1} parent=27 // pred_check
          %p182 = pneg %p37
        $region30: #{tpu_custom_call.1} parent=27 // pred_check_branch
          %184 = sbr.rel (%p182) target = $region32
        $region31: #{tpu_custom_call.1} parent=27 // pred_region
          %s185 = sand.u32 %s27, 1
          %s186 = scalar_lea.sflag [#allocation3], %s185
          %s187 = sand.u32 %s27, 1
          %s188 = smul.addr %s187, 128
          %s189 = scalar_lea.vmem [#allocation2], %s188
          %191 = vsyncadd %s186, 0
          %s192 = smul.addr %s17, 16
          %s193 = smul.addr %s192, 8
          %s194 = scalar_lea.hbm %s0, %s193
          %s195 = sshll.u32 %s194, 4
          %s196 = int_to_ptr.hbm [resolvable:$true] %s195
          %s197 = sshll.u32 %s189, 4
          %s198 = int_to_ptr.vmem [resolvable:$true] %s197
          %203 = dma.hbm_to_vmem [thread:$0]  %s196, 2048, %s198, %s186, 256, 256, 16
        $region32: #{tpu_custom_call.1} parent=27 // pred_fallthru
          _
      $region28: #{tpu_custom_call.1} parent=5 // pred_fallthru
        _
      %p204 = scmp.le.s32.totalorder 1, %s17
      %p205 = scmp.lt.s32.totalorder %s17, 3
      %p206 = pnand %p204, %p205
      %p207 = pneg %p206
      // Predicated region
      $region33: #{tpu_custom_call.1} parent=5 // pred_check
        _
      $region34: #{tpu_custom_call.1} parent=5 // pred_check_branch
        %209 = sbr.rel (%p206) target = $region36
      $region35: #{tpu_custom_call.1} parent=5 // pred_region
        %s210 = ssub.s32 %s17, 1
        %s211 = sand.u32 %s30, 1
        %s212 = scalar_lea.sflag [#allocation3], %s211
        %s213 = sand.u32 %s30, 1
        %s214 = smul.addr %s213, 128
        %s215 = scalar_lea.vmem [#allocation2], %s214
        // Predicated region
        $region37: #{tpu_custom_call.1} parent=35 // pred_check
          %p216 = pneg %p43
        $region38: #{tpu_custom_call.1} parent=35 // pred_check_branch
          %218 = sbr.rel (%p216) target = $region40
        $region39: #{tpu_custom_call.1} parent=35 // pred_region
          %220 = dma.done %s212, 2048
        $region40: #{tpu_custom_call.1} parent=35 // pred_fallthru
          _
        // Predicated region
        $region41: #{tpu_custom_call.1} parent=35 // pred_check
          %p221 = pneg %p64
        $region42: #{tpu_custom_call.1} parent=35 // pred_check_branch
          %223 = sbr.rel (%p221) target = $region44
        $region43: #{tpu_custom_call.1} parent=35 // pred_region
          %225 = dma.done [#allocation6], 24576
        $region44: #{tpu_custom_call.1} parent=35 // pred_fallthru
          _
        // Predicated region
        $region45: #{tpu_custom_call.1} parent=35 // pred_check
          %p226 = pneg %p85
        $region46: #{tpu_custom_call.1} parent=35 // pred_check_branch
          %228 = sbr.rel (%p226) target = $region48
        $region47: #{tpu_custom_call.1} parent=35 // pred_region
          %230 = dma.done [#allocation6], 8192
        $region48: #{tpu_custom_call.1} parent=35 // pred_fallthru
          _
        %s231 = sand.u32 %s30, 1
        %s232 = scalar_lea.sflag [#allocation3], %s231
        %s233 = sand.u32 %s30, 1
        %s234 = smul.addr %s233, 128
        %s235 = scalar_lea.vmem [#allocation2], %s234
        %p236 = pneg %p43
        %p237 = pneg %p40
        %p238 = pneg %p64
        %p239 = pneg %p61
        %p240 = pneg %p85
        %p241 = pneg %p82
        %p242 = pneg %p106
        %p243 = pneg %p103
        %p244 = pneg %p132
        %p245 = pneg %p129
        %s246 = sand.u32 %s119, 1
        %s247 = scalar_lea.sflag [#allocation4], %s246
        %s248 = sand.u32 %s119, 1
        %s249 = smul.addr %s248, 128
        %s250 = scalar_lea.vmem [#allocation8], %s249
        %v251 = vld [vmem:[%s215] sm:$0xff]
        %v252 = vld [vmem:[%s215 + $0x8] sm:$0xff]
        %v253 = vld [vmem:[%s215 + $0x10] sm:$0xff]
        %v254 = vld [vmem:[%s215 + $0x18] sm:$0xff]
        %v255 = vld [vmem:[%s215 + $0x20] sm:$0xff]
        %v256 = vld [vmem:[%s215 + $0x28] sm:$0xff]
        %v257 = vld [vmem:[%s215 + $0x30] sm:$0xff]
        %v258 = vld [vmem:[%s215 + $0x38] sm:$0xff]
        %v259 = vld [vmem:[%s215 + $0x40] sm:$0xff]
        %v260 = vld [vmem:[%s215 + $0x48] sm:$0xff]
        %v261 = vld [vmem:[%s215 + $0x50] sm:$0xff]
        %v262 = vld [vmem:[%s215 + $0x58] sm:$0xff]
        %v263 = vld [vmem:[%s215 + $0x60] sm:$0xff]
        %v264 = vld [vmem:[%s215 + $0x68] sm:$0xff]
        %v265 = vld [vmem:[%s215 + $0x70] sm:$0xff]
        %v266 = vld [vmem:[%s215 + $0x78] sm:$0xff]
        %v267 = vld [vmem:[#allocation5] sm:$0xff]
        %v268 = vld [vmem:[#allocation5 + $0x8] sm:$0xff]
        %v269 = vld [vmem:[#allocation5 + $0x10] sm:$0xff]
        %v270 = vld [vmem:[#allocation5 + $0x18] sm:$0xff]
        %v271 = vld [vmem:[#allocation5 + $0x20] sm:$0xff]
        %v272 = vld [vmem:[#allocation5 + $0x28] sm:$0xff]
        %v273 = vld [vmem:[#allocation5 + $0x30] sm:$0xff]
        %v274 = vld [vmem:[#allocation5 + $0x38] sm:$0xff]
        %v275 = vld [vmem:[#allocation5 + $0x40] sm:$0xff]
        %v276 = vld [vmem:[#allocation5 + $0x48] sm:$0xff]
        %v277 = vld [vmem:[#allocation5 + $0x50] sm:$0xff]
        %v278 = vld [vmem:[#allocation5 + $0x58] sm:$0xff]
        %v279 = vld [vmem:[#allocation5 + $0x60] sm:$0xff]
        %v280 = vld [vmem:[#allocation5 + $0x68] sm:$0xff]
        %v281 = vld [vmem:[#allocation5 + $0x70] sm:$0xff]
        %v282 = vld [vmem:[#allocation5 + $0x78] sm:$0xff]
        %v283 = vld [vmem:[#allocation5 + $0x80] sm:$0xff]
        %v284 = vld [vmem:[#allocation5 + $0x88] sm:$0xff]
        %v285 = vld [vmem:[#allocation5 + $0x90] sm:$0xff]
        %v286 = vld [vmem:[#allocation5 + $0x98] sm:$0xff]
        %v287 = vld [vmem:[#allocation5 + $0xa0] sm:$0xff]
        %v288 = vld [vmem:[#allocation5 + $0xa8] sm:$0xff]
        %v289 = vld [vmem:[#allocation5 + $0xb0] sm:$0xff]
        %v290 = vld [vmem:[#allocation5 + $0xb8] sm:$0xff]
        %v291 = vld [vmem:[#allocation5 + $0xc0] sm:$0xff]
        %v292 = vld [vmem:[#allocation5 + $0xc8] sm:$0xff]
        %v293 = vld [vmem:[#allocation5 + $0xd0] sm:$0xff]
        %v294 = vld [vmem:[#allocation5 + $0xd8] sm:$0xff]
        %v295 = vld [vmem:[#allocation5 + $0xe0] sm:$0xff]
        %v296 = vld [vmem:[#allocation5 + $0xe8] sm:$0xff]
        %v297 = vld [vmem:[#allocation5 + $0xf0] sm:$0xff]
        %v298 = vld [vmem:[#allocation5 + $0xf8] sm:$0xff]
        %v299 = vld [vmem:[#allocation5 + $0x100] sm:$0xff]
        %v300 = vld [vmem:[#allocation5 + $0x108] sm:$0xff]
        %v301 = vld [vmem:[#allocation5 + $0x110] sm:$0xff]
        %v302 = vld [vmem:[#allocation5 + $0x118] sm:$0xff]
        %v303 = vld [vmem:[#allocation5 + $0x120] sm:$0xff]
        %v304 = vld [vmem:[#allocation5 + $0x128] sm:$0xff]
        %v305 = vld [vmem:[#allocation5 + $0x130] sm:$0xff]
        %v306 = vld [vmem:[#allocation5 + $0x138] sm:$0xff]
        %v307 = vld [vmem:[#allocation5 + $0x140] sm:$0xff]
        %v308 = vld [vmem:[#allocation5 + $0x148] sm:$0xff]
        %v309 = vld [vmem:[#allocation5 + $0x150] sm:$0xff]
        %v310 = vld [vmem:[#allocation5 + $0x158] sm:$0xff]
        %v311 = vld [vmem:[#allocation5 + $0x160] sm:$0xff]
        %v312 = vld [vmem:[#allocation5 + $0x168] sm:$0xff]
        %v313 = vld [vmem:[#allocation5 + $0x170] sm:$0xff]
        %v314 = vld [vmem:[#allocation5 + $0x178] sm:$0xff]
        %v315 = vld [vmem:[#allocation5 + $0x180] sm:$0xff]
        %v316 = vld [vmem:[#allocation5 + $0x188] sm:$0xff]
        %v317 = vld [vmem:[#allocation5 + $0x190] sm:$0xff]
        %v318 = vld [vmem:[#allocation5 + $0x198] sm:$0xff]
        %v319 = vld [vmem:[#allocation5 + $0x1a0] sm:$0xff]
        %v320 = vld [vmem:[#allocation5 + $0x1a8] sm:$0xff]
        %v321 = vld [vmem:[#allocation5 + $0x1b0] sm:$0xff]
        %v322 = vld [vmem:[#allocation5 + $0x1b8] sm:$0xff]
        %v323 = vld [vmem:[#allocation5 + $0x1c0] sm:$0xff]
        %v324 = vld [vmem:[#allocation5 + $0x1c8] sm:$0xff]
        %v325 = vld [vmem:[#allocation5 + $0x1d0] sm:$0xff]
        %v326 = vld [vmem:[#allocation5 + $0x1d8] sm:$0xff]
        %v327 = vld [vmem:[#allocation5 + $0x1e0] sm:$0xff]
        %v328 = vld [vmem:[#allocation5 + $0x1e8] sm:$0xff]
        %v329 = vld [vmem:[#allocation5 + $0x1f0] sm:$0xff]
        %v330 = vld [vmem:[#allocation5 + $0x1f8] sm:$0xff]
        %v331 = vld [vmem:[#allocation5 + $0x200] sm:$0xff]
        %v332 = vld [vmem:[#allocation5 + $0x208] sm:$0xff]
        %v333 = vld [vmem:[#allocation5 + $0x210] sm:$0xff]
        %v334 = vld [vmem:[#allocation5 + $0x218] sm:$0xff]
        %v335 = vld [vmem:[#allocation5 + $0x220] sm:$0xff]
        %v336 = vld [vmem:[#allocation5 + $0x228] sm:$0xff]
        %v337 = vld [vmem:[#allocation5 + $0x230] sm:$0xff]
        %v338 = vld [vmem:[#allocation5 + $0x238] sm:$0xff]
        %v339 = vld [vmem:[#allocation5 + $0x240] sm:$0xff]
        %v340 = vld [vmem:[#allocation5 + $0x248] sm:$0xff]
        %v341 = vld [vmem:[#allocation5 + $0x250] sm:$0xff]
        %v342 = vld [vmem:[#allocation5 + $0x258] sm:$0xff]
        %v343 = vld [vmem:[#allocation5 + $0x260] sm:$0xff]
        %v344 = vld [vmem:[#allocation5 + $0x268] sm:$0xff]
        %v345 = vld [vmem:[#allocation5 + $0x270] sm:$0xff]
        %v346 = vld [vmem:[#allocation5 + $0x278] sm:$0xff]
        %v347 = vld [vmem:[#allocation5 + $0x280] sm:$0xff]
        %v348 = vld [vmem:[#allocation5 + $0x288] sm:$0xff]
        %v349 = vld [vmem:[#allocation5 + $0x290] sm:$0xff]
        %v350 = vld [vmem:[#allocation5 + $0x298] sm:$0xff]
        %v351 = vld [vmem:[#allocation5 + $0x2a0] sm:$0xff]
        %v352 = vld [vmem:[#allocation5 + $0x2a8] sm:$0xff]
        %v353 = vld [vmem:[#allocation5 + $0x2b0] sm:$0xff]
        %v354 = vld [vmem:[#allocation5 + $0x2b8] sm:$0xff]
        %v355 = vld [vmem:[#allocation5 + $0x2c0] sm:$0xff]
        %v356 = vld [vmem:[#allocation5 + $0x2c8] sm:$0xff]
        %v357 = vld [vmem:[#allocation5 + $0x2d0] sm:$0xff]
        %v358 = vld [vmem:[#allocation5 + $0x2d8] sm:$0xff]
        %v359 = vld [vmem:[#allocation5 + $0x2e0] sm:$0xff]
        %v360 = vld [vmem:[#allocation5 + $0x2e8] sm:$0xff]
        %v361 = vld [vmem:[#allocation5 + $0x2f0] sm:$0xff]
        %v362 = vld [vmem:[#allocation5 + $0x2f8] sm:$0xff]
        %v363 = vld [vmem:[#allocation5 + $0x300] sm:$0xff]
        %v364 = vld [vmem:[#allocation5 + $0x308] sm:$0xff]
        %v365 = vld [vmem:[#allocation5 + $0x310] sm:$0xff]
        %v366 = vld [vmem:[#allocation5 + $0x318] sm:$0xff]
        %v367 = vld [vmem:[#allocation5 + $0x320] sm:$0xff]
        %v368 = vld [vmem:[#allocation5 + $0x328] sm:$0xff]
        %v369 = vld [vmem:[#allocation5 + $0x330] sm:$0xff]
        %v370 = vld [vmem:[#allocation5 + $0x338] sm:$0xff]
        %v371 = vld [vmem:[#allocation5 + $0x340] sm:$0xff]
        %v372 = vld [vmem:[#allocation5 + $0x348] sm:$0xff]
        %v373 = vld [vmem:[#allocation5 + $0x350] sm:$0xff]
        %v374 = vld [vmem:[#allocation5 + $0x358] sm:$0xff]
        %v375 = vld [vmem:[#allocation5 + $0x360] sm:$0xff]
        %v376 = vld [vmem:[#allocation5 + $0x368] sm:$0xff]
        %v377 = vld [vmem:[#allocation5 + $0x370] sm:$0xff]
        %v378 = vld [vmem:[#allocation5 + $0x378] sm:$0xff]
        %v379 = vld [vmem:[#allocation5 + $0x380] sm:$0xff]
        %v380 = vld [vmem:[#allocation5 + $0x388] sm:$0xff]
        %v381 = vld [vmem:[#allocation5 + $0x390] sm:$0xff]
        %v382 = vld [vmem:[#allocation5 + $0x398] sm:$0xff]
        %v383 = vld [vmem:[#allocation5 + $0x3a0] sm:$0xff]
        %v384 = vld [vmem:[#allocation5 + $0x3a8] sm:$0xff]
        %v385 = vld [vmem:[#allocation5 + $0x3b0] sm:$0xff]
        %v386 = vld [vmem:[#allocation5 + $0x3b8] sm:$0xff]
        %v387 = vld [vmem:[#allocation5 + $0x3c0] sm:$0xff]
        %v388 = vld [vmem:[#allocation5 + $0x3c8] sm:$0xff]
        %v389 = vld [vmem:[#allocation5 + $0x3d0] sm:$0xff]
        %v390 = vld [vmem:[#allocation5 + $0x3d8] sm:$0xff]
        %v391 = vld [vmem:[#allocation5 + $0x3e0] sm:$0xff]
        %v392 = vld [vmem:[#allocation5 + $0x3e8] sm:$0xff]
        %v393 = vld [vmem:[#allocation5 + $0x3f0] sm:$0xff]
        %v394 = vld [vmem:[#allocation5 + $0x3f8] sm:$0xff]
        %v395 = vld [vmem:[#allocation5 + $0x400] sm:$0xff]
        %v396 = vld [vmem:[#allocation5 + $0x408] sm:$0xff]
        %v397 = vld [vmem:[#allocation5 + $0x410] sm:$0xff]
        %v398 = vld [vmem:[#allocation5 + $0x418] sm:$0xff]
        %v399 = vld [vmem:[#allocation5 + $0x420] sm:$0xff]
        %v400 = vld [vmem:[#allocation5 + $0x428] sm:$0xff]
        %v401 = vld [vmem:[#allocation5 + $0x430] sm:$0xff]
        %v402 = vld [vmem:[#allocation5 + $0x438] sm:$0xff]
        %v403 = vld [vmem:[#allocation5 + $0x440] sm:$0xff]
        %v404 = vld [vmem:[#allocation5 + $0x448] sm:$0xff]
        %v405 = vld [vmem:[#allocation5 + $0x450] sm:$0xff]
        %v406 = vld [vmem:[#allocation5 + $0x458] sm:$0xff]
        %v407 = vld [vmem:[#allocation5 + $0x460] sm:$0xff]
        %v408 = vld [vmem:[#allocation5 + $0x468] sm:$0xff]
        %v409 = vld [vmem:[#allocation5 + $0x470] sm:$0xff]
        %v410 = vld [vmem:[#allocation5 + $0x478] sm:$0xff]
        %v411 = vld [vmem:[#allocation5 + $0x480] sm:$0xff]
        %v412 = vld [vmem:[#allocation5 + $0x488] sm:$0xff]
        %v413 = vld [vmem:[#allocation5 + $0x490] sm:$0xff]
        %v414 = vld [vmem:[#allocation5 + $0x498] sm:$0xff]
        %v415 = vld [vmem:[#allocation5 + $0x4a0] sm:$0xff]
        %v416 = vld [vmem:[#allocation5 + $0x4a8] sm:$0xff]
        %v417 = vld [vmem:[#allocation5 + $0x4b0] sm:$0xff]
        %v418 = vld [vmem:[#allocation5 + $0x4b8] sm:$0xff]
        %v419 = vld [vmem:[#allocation5 + $0x4c0] sm:$0xff]
        %v420 = vld [vmem:[#allocation5 + $0x4c8] sm:$0xff]
        %v421 = vld [vmem:[#allocation5 + $0x4d0] sm:$0xff]
        %v422 = vld [vmem:[#allocation5 + $0x4d8] sm:$0xff]
        %v423 = vld [vmem:[#allocation5 + $0x4e0] sm:$0xff]
        %v424 = vld [vmem:[#allocation5 + $0x4e8] sm:$0xff]
        %v425 = vld [vmem:[#allocation5 + $0x4f0] sm:$0xff]
        %v426 = vld [vmem:[#allocation5 + $0x4f8] sm:$0xff]
        %v427 = vld [vmem:[#allocation5 + $0x500] sm:$0xff]
        %v428 = vld [vmem:[#allocation5 + $0x508] sm:$0xff]
        %v429 = vld [vmem:[#allocation5 + $0x510] sm:$0xff]
        %v430 = vld [vmem:[#allocation5 + $0x518] sm:$0xff]
        %v431 = vld [vmem:[#allocation5 + $0x520] sm:$0xff]
        %v432 = vld [vmem:[#allocation5 + $0x528] sm:$0xff]
        %v433 = vld [vmem:[#allocation5 + $0x530] sm:$0xff]
        %v434 = vld [vmem:[#allocation5 + $0x538] sm:$0xff]
        %v435 = vld [vmem:[#allocation5 + $0x540] sm:$0xff]
        %v436 = vld [vmem:[#allocation5 + $0x548] sm:$0xff]
        %v437 = vld [vmem:[#allocation5 + $0x550] sm:$0xff]
        %v438 = vld [vmem:[#allocation5 + $0x558] sm:$0xff]
        %v439 = vld [vmem:[#allocation5 + $0x560] sm:$0xff]
        %v440 = vld [vmem:[#allocation5 + $0x568] sm:$0xff]
        %v441 = vld [vmem:[#allocation5 + $0x570] sm:$0xff]
        %v442 = vld [vmem:[#allocation5 + $0x578] sm:$0xff]
        %v443 = vld [vmem:[#allocation5 + $0x580] sm:$0xff]
        %v444 = vld [vmem:[#allocation5 + $0x588] sm:$0xff]
        %v445 = vld [vmem:[#allocation5 + $0x590] sm:$0xff]
        %v446 = vld [vmem:[#allocation5 + $0x598] sm:$0xff]
        %v447 = vld [vmem:[#allocation5 + $0x5a0] sm:$0xff]
        %v448 = vld [vmem:[#allocation5 + $0x5a8] sm:$0xff]
        %v449 = vld [vmem:[#allocation5 + $0x5b0] sm:$0xff]
        %v450 = vld [vmem:[#allocation5 + $0x5b8] sm:$0xff]
        %v451 = vld [vmem:[#allocation5 + $0x5c0] sm:$0xff]
        %v452 = vld [vmem:[#allocation5 + $0x5c8] sm:$0xff]
        %v453 = vld [vmem:[#allocation5 + $0x5d0] sm:$0xff]
        %v454 = vld [vmem:[#allocation5 + $0x5d8] sm:$0xff]
        %v455 = vld [vmem:[#allocation5 + $0x5e0] sm:$0xff]
        %v456 = vld [vmem:[#allocation5 + $0x5e8] sm:$0xff]
        %v457 = vld [vmem:[#allocation5 + $0x5f0] sm:$0xff]
        %v458 = vld [vmem:[#allocation5 + $0x5f8] sm:$0xff]
        %v459 = vld [vmem:[#allocation7] sm:$0xff]
        %v460 = vld [vmem:[#allocation7 + $0x8] sm:$0xff]
        %v461 = vld [vmem:[#allocation7 + $0x10] sm:$0xff]
        %v462 = vld [vmem:[#allocation7 + $0x18] sm:$0xff]
        %v463 = vld [vmem:[#allocation7 + $0x20] sm:$0xff]
        %v464 = vld [vmem:[#allocation7 + $0x28] sm:$0xff]
        %v465 = vld [vmem:[#allocation7 + $0x30] sm:$0xff]
        %v466 = vld [vmem:[#allocation7 + $0x38] sm:$0xff]
        %v467 = vld [vmem:[#allocation7 + $0x40] sm:$0xff]
        %v468 = vld [vmem:[#allocation7 + $0x48] sm:$0xff]
        %v469 = vld [vmem:[#allocation7 + $0x50] sm:$0xff]
        %v470 = vld [vmem:[#allocation7 + $0x58] sm:$0xff]
        %v471 = vld [vmem:[#allocation7 + $0x60] sm:$0xff]
        %v472 = vld [vmem:[#allocation7 + $0x68] sm:$0xff]
        %v473 = vld [vmem:[#allocation7 + $0x70] sm:$0xff]
        %v474 = vld [vmem:[#allocation7 + $0x78] sm:$0xff]
        %v475 = vld [vmem:[#allocation7 + $0x80] sm:$0xff]
        %v476 = vld [vmem:[#allocation7 + $0x88] sm:$0xff]
        %v477 = vld [vmem:[#allocation7 + $0x90] sm:$0xff]
        %v478 = vld [vmem:[#allocation7 + $0x98] sm:$0xff]
        %v479 = vld [vmem:[#allocation7 + $0xa0] sm:$0xff]
        %v480 = vld [vmem:[#allocation7 + $0xa8] sm:$0xff]
        %v481 = vld [vmem:[#allocation7 + $0xb0] sm:$0xff]
        %v482 = vld [vmem:[#allocation7 + $0xb8] sm:$0xff]
        %v483 = vld [vmem:[#allocation7 + $0xc0] sm:$0xff]
        %v484 = vld [vmem:[#allocation7 + $0xc8] sm:$0xff]
        %v485 = vld [vmem:[#allocation7 + $0xd0] sm:$0xff]
        %v486 = vld [vmem:[#allocation7 + $0xd8] sm:$0xff]
        %v487 = vld [vmem:[#allocation7 + $0xe0] sm:$0xff]
        %v488 = vld [vmem:[#allocation7 + $0xe8] sm:$0xff]
        %v489 = vld [vmem:[#allocation7 + $0xf0] sm:$0xff]
        %v490 = vld [vmem:[#allocation7 + $0xf8] sm:$0xff]
        %v491 = vld [vmem:[#allocation7 + $0x100] sm:$0xff]
        %v492 = vld [vmem:[#allocation7 + $0x108] sm:$0xff]
        %v493 = vld [vmem:[#allocation7 + $0x110] sm:$0xff]
        %v494 = vld [vmem:[#allocation7 + $0x118] sm:$0xff]
        %v495 = vld [vmem:[#allocation7 + $0x120] sm:$0xff]
        %v496 = vld [vmem:[#allocation7 + $0x128] sm:$0xff]
        %v497 = vld [vmem:[#allocation7 + $0x130] sm:$0xff]
        %v498 = vld [vmem:[#allocation7 + $0x138] sm:$0xff]
        %v499 = vld [vmem:[#allocation7 + $0x140] sm:$0xff]
        %v500 = vld [vmem:[#allocation7 + $0x148] sm:$0xff]
        %v501 = vld [vmem:[#allocation7 + $0x150] sm:$0xff]
        %v502 = vld [vmem:[#allocation7 + $0x158] sm:$0xff]
        %v503 = vld [vmem:[#allocation7 + $0x160] sm:$0xff]
        %v504 = vld [vmem:[#allocation7 + $0x168] sm:$0xff]
        %v505 = vld [vmem:[#allocation7 + $0x170] sm:$0xff]
        %v506 = vld [vmem:[#allocation7 + $0x178] sm:$0xff]
        %v507 = vld [vmem:[#allocation7 + $0x180] sm:$0xff]
        %v508 = vld [vmem:[#allocation7 + $0x188] sm:$0xff]
        %v509 = vld [vmem:[#allocation7 + $0x190] sm:$0xff]
        %v510 = vld [vmem:[#allocation7 + $0x198] sm:$0xff]
        %v511 = vld [vmem:[#allocation7 + $0x1a0] sm:$0xff]
        %v512 = vld [vmem:[#allocation7 + $0x1a8] sm:$0xff]
        %v513 = vld [vmem:[#allocation7 + $0x1b0] sm:$0xff]
        %v514 = vld [vmem:[#allocation7 + $0x1b8] sm:$0xff]
        %v515 = vld [vmem:[#allocation7 + $0x1c0] sm:$0xff]
        %v516 = vld [vmem:[#allocation7 + $0x1c8] sm:$0xff]
        %v517 = vld [vmem:[#allocation7 + $0x1d0] sm:$0xff]
        %v518 = vld [vmem:[#allocation7 + $0x1d8] sm:$0xff]
        %v519 = vld [vmem:[#allocation7 + $0x1e0] sm:$0xff]
        %v520 = vld [vmem:[#allocation7 + $0x1e8] sm:$0xff]
        %v521 = vld [vmem:[#allocation7 + $0x1f0] sm:$0xff]
        %v522 = vld [vmem:[#allocation7 + $0x1f8] sm:$0xff]
        %v523 = vld [vmem:[%s3] sm:$0x3]
        %524 = vmatpush.msra.mxu0 %v357
        %525 = vmatpush.msra.mxu0 %v351
        %526 = vmatpush.msra.mxu0 %v345
        %527 = vmatpush.msra.mxu0 %v339
        %528 = vmatpush.msra.mxu0 %v333
        %529 = vmatpush.msra.mxu0 %v327
        %530 = vmatpush.msra.mxu0 %v321
        %531 = vmatpush.msra.mxu0 %v315
        %532 = vmatpush.msra.mxu0 %v309
        %533 = vmatpush.msra.mxu0 %v303
        %534 = vmatpush.msra.mxu0 %v297
        %535 = vmatpush.msra.mxu0 %v291
        %536 = vmatpush.msra.mxu0 %v285
        %537 = vmatpush.msra.mxu0 %v279
        %538 = vmatpush.msra.mxu0 %v273
        %539 = vmatpush.msra.mxu0 %v267
        %540 = vmatmul.f32.gmra.mxu0 %v251
        %v541 = vpop.f32.mrf.mxu0
        %v542 = vadd.f32 0.0, %v541
        %543 = vmatmul.f32.gmra.mxu0 %v253
        %v544 = vpop.f32.mrf.mxu0
        %v545 = vadd.f32 0.0, %v544
        %546 = vmatmul.f32.gmra.mxu0 %v255
        %v547 = vpop.f32.mrf.mxu0
        %v548 = vadd.f32 0.0, %v547
        %549 = vmatmul.f32.gmra.mxu0 %v257
        %v550 = vpop.f32.mrf.mxu0
        %v551 = vadd.f32 0.0, %v550
        %552 = vmatmul.f32.gmra.mxu0 %v259
        %v553 = vpop.f32.mrf.mxu0
        %v554 = vadd.f32 0.0, %v553
        %555 = vmatmul.f32.gmra.mxu0 %v261
        %v556 = vpop.f32.mrf.mxu0
        %v557 = vadd.f32 0.0, %v556
        %558 = vmatmul.f32.gmra.mxu0 %v263
        %v559 = vpop.f32.mrf.mxu0
        %v560 = vadd.f32 0.0, %v559
        %561 = vmatmul.f32.gmra.mxu0 %v265
        %v562 = vpop.f32.mrf.mxu0
        %v563 = vadd.f32 0.0, %v562
        %564 = vdwg.mxu0
        %565 = vmatpush.msra.mxu0 %v453
        %566 = vmatpush.msra.mxu0 %v447
        %567 = vmatpush.msra.mxu0 %v441
        %568 = vmatpush.msra.mxu0 %v435
        %569 = vmatpush.msra.mxu0 %v429
        %570 = vmatpush.msra.mxu0 %v423
        %571 = vmatpush.msra.mxu0 %v417
        %572 = vmatpush.msra.mxu0 %v411
        %573 = vmatpush.msra.mxu0 %v405
        %574 = vmatpush.msra.mxu0 %v399
        %575 = vmatpush.msra.mxu0 %v393
        %576 = vmatpush.msra.mxu0 %v387
        %577 = vmatpush.msra.mxu0 %v381
        %578 = vmatpush.msra.mxu0 %v375
        %579 = vmatpush.msra.mxu0 %v369
        %580 = vmatpush.msra.mxu0 %v363
        %581 = vmatmul.f32.gmra.mxu0 %v252
        %v582 = vpop.f32.mrf.mxu0
        %v583 = vadd.f32 %v542, %v582
        %584 = vmatmul.f32.gmra.mxu0 %v254
        %v585 = vpop.f32.mrf.mxu0
        %v586 = vadd.f32 %v545, %v585
        %587 = vmatmul.f32.gmra.mxu0 %v256
        %v588 = vpop.f32.mrf.mxu0
        %v589 = vadd.f32 %v548, %v588
        %590 = vmatmul.f32.gmra.mxu0 %v258
        %v591 = vpop.f32.mrf.mxu0
        %v592 = vadd.f32 %v551, %v591
        %593 = vmatmul.f32.gmra.mxu0 %v260
        %v594 = vpop.f32.mrf.mxu0
        %v595 = vadd.f32 %v554, %v594
        %596 = vmatmul.f32.gmra.mxu0 %v262
        %v597 = vpop.f32.mrf.mxu0
        %v598 = vadd.f32 %v557, %v597
        %599 = vmatmul.f32.gmra.mxu0 %v264
        %v600 = vpop.f32.mrf.mxu0
        %v601 = vadd.f32 %v560, %v600
        %602 = vmatmul.f32.gmra.mxu0 %v266
        %v603 = vpop.f32.mrf.mxu0
        %v604 = vadd.f32 %v563, %v603
        %605 = vdwg.mxu0
        %606 = vmatpush.msra.mxu0 %v358
        %607 = vmatpush.msra.mxu0 %v352
        %608 = vmatpush.msra.mxu0 %v346
        %609 = vmatpush.msra.mxu0 %v340
        %610 = vmatpush.msra.mxu0 %v334
        %611 = vmatpush.msra.mxu0 %v328
        %612 = vmatpush.msra.mxu0 %v322
        %613 = vmatpush.msra.mxu0 %v316
        %614 = vmatpush.msra.mxu0 %v310
        %615 = vmatpush.msra.mxu0 %v304
        %616 = vmatpush.msra.mxu0 %v298
        %617 = vmatpush.msra.mxu0 %v292
        %618 = vmatpush.msra.mxu0 %v286
        %619 = vmatpush.msra.mxu0 %v280
        %620 = vmatpush.msra.mxu0 %v274
        %621 = vmatpush.msra.mxu0 %v268
        %622 = vmatmul.f32.gmra.mxu0 %v251
        %v623 = vpop.f32.mrf.mxu0
        %v624 = vadd.f32 0.0, %v623
        %625 = vmatmul.f32.gmra.mxu0 %v253
        %v626 = vpop.f32.mrf.mxu0
        %v627 = vadd.f32 0.0, %v626
        %628 = vmatmul.f32.gmra.mxu0 %v255
        %v629 = vpop.f32.mrf.mxu0
        %v630 = vadd.f32 0.0, %v629
        %631 = vmatmul.f32.gmra.mxu0 %v257
        %v632 = vpop.f32.mrf.mxu0
        %v633 = vadd.f32 0.0, %v632
        %634 = vmatmul.f32.gmra.mxu0 %v259
        %v635 = vpop.f32.mrf.mxu0
        %v636 = vadd.f32 0.0, %v635
        %637 = vmatmul.f32.gmra.mxu0 %v261
        %v638 = vpop.f32.mrf.mxu0
        %v639 = vadd.f32 0.0, %v638
        %640 = vmatmul.f32.gmra.mxu0 %v263
        %v641 = vpop.f32.mrf.mxu0
        %v642 = vadd.f32 0.0, %v641
        %643 = vmatmul.f32.gmra.mxu0 %v265
        %v644 = vpop.f32.mrf.mxu0
        %v645 = vadd.f32 0.0, %v644
        %646 = vdwg.mxu0
        %647 = vmatpush.msra.mxu0 %v454
        %648 = vmatpush.msra.mxu0 %v448
        %649 = vmatpush.msra.mxu0 %v442
        %650 = vmatpush.msra.mxu0 %v436
        %651 = vmatpush.msra.mxu0 %v430
        %652 = vmatpush.msra.mxu0 %v424
        %653 = vmatpush.msra.mxu0 %v418
        %654 = vmatpush.msra.mxu0 %v412
        %655 = vmatpush.msra.mxu0 %v406
        %656 = vmatpush.msra.mxu0 %v400
        %657 = vmatpush.msra.mxu0 %v394
        %658 = vmatpush.msra.mxu0 %v388
        %659 = vmatpush.msra.mxu0 %v382
        %660 = vmatpush.msra.mxu0 %v376
        %661 = vmatpush.msra.mxu0 %v370
        %662 = vmatpush.msra.mxu0 %v364
        %663 = vmatmul.f32.gmra.mxu0 %v252
        %v664 = vpop.f32.mrf.mxu0
        %v665 = vadd.f32 %v624, %v664
        %666 = vmatmul.f32.gmra.mxu0 %v254
        %v667 = vpop.f32.mrf.mxu0
        %v668 = vadd.f32 %v627, %v667
        %669 = vmatmul.f32.gmra.mxu0 %v256
        %v670 = vpop.f32.mrf.mxu0
        %v671 = vadd.f32 %v630, %v670
        %672 = vmatmul.f32.gmra.mxu0 %v258
        %v673 = vpop.f32.mrf.mxu0
        %v674 = vadd.f32 %v633, %v673
        %675 = vmatmul.f32.gmra.mxu0 %v260
        %v676 = vpop.f32.mrf.mxu0
        %v677 = vadd.f32 %v636, %v676
        %678 = vmatmul.f32.gmra.mxu0 %v262
        %v679 = vpop.f32.mrf.mxu0
        %v680 = vadd.f32 %v639, %v679
        %681 = vmatmul.f32.gmra.mxu0 %v264
        %v682 = vpop.f32.mrf.mxu0
        %v683 = vadd.f32 %v642, %v682
        %684 = vmatmul.f32.gmra.mxu0 %v266
        %v685 = vpop.f32.mrf.mxu0
        %v686 = vadd.f32 %v645, %v685
        %687 = vdwg.mxu0
        %688 = vmatpush.msra.mxu0 %v359
        %689 = vmatpush.msra.mxu0 %v353
        %690 = vmatpush.msra.mxu0 %v347
        %691 = vmatpush.msra.mxu0 %v341
        %692 = vmatpush.msra.mxu0 %v335
        %693 = vmatpush.msra.mxu0 %v329
        %694 = vmatpush.msra.mxu0 %v323
        %695 = vmatpush.msra.mxu0 %v317
        %696 = vmatpush.msra.mxu0 %v311
        %697 = vmatpush.msra.mxu0 %v305
        %698 = vmatpush.msra.mxu0 %v299
        %699 = vmatpush.msra.mxu0 %v293
        %700 = vmatpush.msra.mxu0 %v287
        %701 = vmatpush.msra.mxu0 %v281
        %702 = vmatpush.msra.mxu0 %v275
        %703 = vmatpush.msra.mxu0 %v269
        %704 = vmatmul.f32.gmra.mxu0 %v251
        %v705 = vpop.f32.mrf.mxu0
        %v706 = vadd.f32 0.0, %v705
        %707 = vmatmul.f32.gmra.mxu0 %v253
        %v708 = vpop.f32.mrf.mxu0
        %v709 = vadd.f32 0.0, %v708
        %710 = vmatmul.f32.gmra.mxu0 %v255
        %v711 = vpop.f32.mrf.mxu0
        %v712 = vadd.f32 0.0, %v711
        %713 = vmatmul.f32.gmra.mxu0 %v257
        %v714 = vpop.f32.mrf.mxu0
        %v715 = vadd.f32 0.0, %v714
        %716 = vmatmul.f32.gmra.mxu0 %v259
        %v717 = vpop.f32.mrf.mxu0
        %v718 = vadd.f32 0.0, %v717
        %719 = vmatmul.f32.gmra.mxu0 %v261
        %v720 = vpop.f32.mrf.mxu0
        %v721 = vadd.f32 0.0, %v720
        %722 = vmatmul.f32.gmra.mxu0 %v263
        %v723 = vpop.f32.mrf.mxu0
        %v724 = vadd.f32 0.0, %v723
        %725 = vmatmul.f32.gmra.mxu0 %v265
        %v726 = vpop.f32.mrf.mxu0
        %v727 = vadd.f32 0.0, %v726
        %728 = vdwg.mxu0
        %729 = vmatpush.msra.mxu0 %v455
        %730 = vmatpush.msra.mxu0 %v449
        %731 = vmatpush.msra.mxu0 %v443
        %732 = vmatpush.msra.mxu0 %v437
        %733 = vmatpush.msra.mxu0 %v431
        %734 = vmatpush.msra.mxu0 %v425
        %735 = vmatpush.msra.mxu0 %v419
        %736 = vmatpush.msra.mxu0 %v413
        %737 = vmatpush.msra.mxu0 %v407
        %738 = vmatpush.msra.mxu0 %v401
        %739 = vmatpush.msra.mxu0 %v395
        %740 = vmatpush.msra.mxu0 %v389
        %741 = vmatpush.msra.mxu0 %v383
        %742 = vmatpush.msra.mxu0 %v377
        %743 = vmatpush.msra.mxu0 %v371
        %744 = vmatpush.msra.mxu0 %v365
        %745 = vmatmul.f32.gmra.mxu0 %v252
        %v746 = vpop.f32.mrf.mxu0
        %v747 = vadd.f32 %v706, %v746
        %748 = vmatmul.f32.gmra.mxu0 %v254
        %v749 = vpop.f32.mrf.mxu0
        %v750 = vadd.f32 %v709, %v749
        %751 = vmatmul.f32.gmra.mxu0 %v256
        %v752 = vpop.f32.mrf.mxu0
        %v753 = vadd.f32 %v712, %v752
        %754 = vmatmul.f32.gmra.mxu0 %v258
        %v755 = vpop.f32.mrf.mxu0
        %v756 = vadd.f32 %v715, %v755
        %757 = vmatmul.f32.gmra.mxu0 %v260
        %v758 = vpop.f32.mrf.mxu0
        %v759 = vadd.f32 %v718, %v758
        %760 = vmatmul.f32.gmra.mxu0 %v262
        %v761 = vpop.f32.mrf.mxu0
        %v762 = vadd.f32 %v721, %v761
        %763 = vmatmul.f32.gmra.mxu0 %v264
        %v764 = vpop.f32.mrf.mxu0
        %v765 = vadd.f32 %v724, %v764
        %766 = vmatmul.f32.gmra.mxu0 %v266
        %v767 = vpop.f32.mrf.mxu0
        %v768 = vadd.f32 %v727, %v767
        %769 = vdwg.mxu0
        %770 = vmatpush.msra.mxu0 %v360
        %771 = vmatpush.msra.mxu0 %v354
        %772 = vmatpush.msra.mxu0 %v348
        %773 = vmatpush.msra.mxu0 %v342
        %774 = vmatpush.msra.mxu0 %v336
        %775 = vmatpush.msra.mxu0 %v330
        %776 = vmatpush.msra.mxu0 %v324
        %777 = vmatpush.msra.mxu0 %v318
        %778 = vmatpush.msra.mxu0 %v312
        %779 = vmatpush.msra.mxu0 %v306
        %780 = vmatpush.msra.mxu0 %v300
        %781 = vmatpush.msra.mxu0 %v294
        %782 = vmatpush.msra.mxu0 %v288
        %783 = vmatpush.msra.mxu0 %v282
        %784 = vmatpush.msra.mxu0 %v276
        %785 = vmatpush.msra.mxu0 %v270
        %786 = vmatmul.f32.gmra.mxu0 %v251
        %v787 = vpop.f32.mrf.mxu0
        %v788 = vadd.f32 0.0, %v787
        %789 = vmatmul.f32.gmra.mxu0 %v253
        %v790 = vpop.f32.mrf.mxu0
        %v791 = vadd.f32 0.0, %v790
        %792 = vmatmul.f32.gmra.mxu0 %v255
        %v793 = vpop.f32.mrf.mxu0
        %v794 = vadd.f32 0.0, %v793
        %795 = vmatmul.f32.gmra.mxu0 %v257
        %v796 = vpop.f32.mrf.mxu0
        %v797 = vadd.f32 0.0, %v796
        %798 = vmatmul.f32.gmra.mxu0 %v259
        %v799 = vpop.f32.mrf.mxu0
        %v800 = vadd.f32 0.0, %v799
        %801 = vmatmul.f32.gmra.mxu0 %v261
        %v802 = vpop.f32.mrf.mxu0
        %v803 = vadd.f32 0.0, %v802
        %804 = vmatmul.f32.gmra.mxu0 %v263
        %v805 = vpop.f32.mrf.mxu0
        %v806 = vadd.f32 0.0, %v805
        %807 = vmatmul.f32.gmra.mxu0 %v265
        %v808 = vpop.f32.mrf.mxu0
        %v809 = vadd.f32 0.0, %v808
        %810 = vdwg.mxu0
        %811 = vmatpush.msra.mxu0 %v456
        %812 = vmatpush.msra.mxu0 %v450
        %813 = vmatpush.msra.mxu0 %v444
        %814 = vmatpush.msra.mxu0 %v438
        %815 = vmatpush.msra.mxu0 %v432
        %816 = vmatpush.msra.mxu0 %v426
        %817 = vmatpush.msra.mxu0 %v420
        %818 = vmatpush.msra.mxu0 %v414
        %819 = vmatpush.msra.mxu0 %v408
        %820 = vmatpush.msra.mxu0 %v402
        %821 = vmatpush.msra.mxu0 %v396
        %822 = vmatpush.msra.mxu0 %v390
        %823 = vmatpush.msra.mxu0 %v384
        %824 = vmatpush.msra.mxu0 %v378
        %825 = vmatpush.msra.mxu0 %v372
        %826 = vmatpush.msra.mxu0 %v366
        %827 = vmatmul.f32.gmra.mxu0 %v252
        %v828 = vpop.f32.mrf.mxu0
        %v829 = vadd.f32 %v788, %v828
        %830 = vmatmul.f32.gmra.mxu0 %v254
        %v831 = vpop.f32.mrf.mxu0
        %v832 = vadd.f32 %v791, %v831
        %833 = vmatmul.f32.gmra.mxu0 %v256
        %v834 = vpop.f32.mrf.mxu0
        %v835 = vadd.f32 %v794, %v834
        %836 = vmatmul.f32.gmra.mxu0 %v258
        %v837 = vpop.f32.mrf.mxu0
        %v838 = vadd.f32 %v797, %v837
        %839 = vmatmul.f32.gmra.mxu0 %v260
        %v840 = vpop.f32.mrf.mxu0
        %v841 = vadd.f32 %v800, %v840
        %842 = vmatmul.f32.gmra.mxu0 %v262
        %v843 = vpop.f32.mrf.mxu0
        %v844 = vadd.f32 %v803, %v843
        %845 = vmatmul.f32.gmra.mxu0 %v264
        %v846 = vpop.f32.mrf.mxu0
        %v847 = vadd.f32 %v806, %v846
        %848 = vmatmul.f32.gmra.mxu0 %v266
        %v849 = vpop.f32.mrf.mxu0
        %v850 = vadd.f32 %v809, %v849
        %851 = vdwg.mxu0
        %852 = vmatpush.msra.mxu0 %v361
        %853 = vmatpush.msra.mxu0 %v355
        %854 = vmatpush.msra.mxu0 %v349
        %855 = vmatpush.msra.mxu0 %v343
        %856 = vmatpush.msra.mxu0 %v337
        %857 = vmatpush.msra.mxu0 %v331
        %858 = vmatpush.msra.mxu0 %v325
        %859 = vmatpush.msra.mxu0 %v319
        %860 = vmatpush.msra.mxu0 %v313
        %861 = vmatpush.msra.mxu0 %v307
        %862 = vmatpush.msra.mxu0 %v301
        %863 = vmatpush.msra.mxu0 %v295
        %864 = vmatpush.msra.mxu0 %v289
        %865 = vmatpush.msra.mxu0 %v283
        %866 = vmatpush.msra.mxu0 %v277
        %867 = vmatpush.msra.mxu0 %v271
        %868 = vmatmul.f32.gmra.mxu0 %v251
        %v869 = vpop.f32.mrf.mxu0
        %v870 = vadd.f32 0.0, %v869
        %871 = vmatmul.f32.gmra.mxu0 %v253
        %v872 = vpop.f32.mrf.mxu0
        %v873 = vadd.f32 0.0, %v872
        %874 = vmatmul.f32.gmra.mxu0 %v255
        %v875 = vpop.f32.mrf.mxu0
        %v876 = vadd.f32 0.0, %v875
        %877 = vmatmul.f32.gmra.mxu0 %v257
        %v878 = vpop.f32.mrf.mxu0
        %v879 = vadd.f32 0.0, %v878
        %880 = vmatmul.f32.gmra.mxu0 %v259
        %v881 = vpop.f32.mrf.mxu0
        %v882 = vadd.f32 0.0, %v881
        %883 = vmatmul.f32.gmra.mxu0 %v261
        %v884 = vpop.f32.mrf.mxu0
        %v885 = vadd.f32 0.0, %v884
        %886 = vmatmul.f32.gmra.mxu0 %v263
        %v887 = vpop.f32.mrf.mxu0
        %v888 = vadd.f32 0.0, %v887
        %889 = vmatmul.f32.gmra.mxu0 %v265
        %v890 = vpop.f32.mrf.mxu0
        %v891 = vadd.f32 0.0, %v890
        %892 = vdwg.mxu0
        %893 = vmatpush.msra.mxu0 %v457
        %894 = vmatpush.msra.mxu0 %v451
        %895 = vmatpush.msra.mxu0 %v445
        %896 = vmatpush.msra.mxu0 %v439
        %897 = vmatpush.msra.mxu0 %v433
        %898 = vmatpush.msra.mxu0 %v427
        %899 = vmatpush.msra.mxu0 %v421
        %900 = vmatpush.msra.mxu0 %v415
        %901 = vmatpush.msra.mxu0 %v409
        %902 = vmatpush.msra.mxu0 %v403
        %903 = vmatpush.msra.mxu0 %v397
        %904 = vmatpush.msra.mxu0 %v391
        %905 = vmatpush.msra.mxu0 %v385
        %906 = vmatpush.msra.mxu0 %v379
        %907 = vmatpush.msra.mxu0 %v373
        %908 = vmatpush.msra.mxu0 %v367
        %909 = vmatmul.f32.gmra.mxu0 %v252
        %v910 = vpop.f32.mrf.mxu0
        %v911 = vadd.f32 %v870, %v910
        %912 = vmatmul.f32.gmra.mxu0 %v254
        %v913 = vpop.f32.mrf.mxu0
        %v914 = vadd.f32 %v873, %v913
        %915 = vmatmul.f32.gmra.mxu0 %v256
        %v916 = vpop.f32.mrf.mxu0
        %v917 = vadd.f32 %v876, %v916
        %918 = vmatmul.f32.gmra.mxu0 %v258
        %v919 = vpop.f32.mrf.mxu0
        %v920 = vadd.f32 %v879, %v919
        %921 = vmatmul.f32.gmra.mxu0 %v260
        %v922 = vpop.f32.mrf.mxu0
        %v923 = vadd.f32 %v882, %v922
        %924 = vmatmul.f32.gmra.mxu0 %v262
        %v925 = vpop.f32.mrf.mxu0
        %v926 = vadd.f32 %v885, %v925
        %927 = vmatmul.f32.gmra.mxu0 %v264
        %v928 = vpop.f32.mrf.mxu0
        %v929 = vadd.f32 %v888, %v928
        %930 = vmatmul.f32.gmra.mxu0 %v266
        %v931 = vpop.f32.mrf.mxu0
        %v932 = vadd.f32 %v891, %v931
        %933 = vdwg.mxu0
        %934 = vmatpush.msra.mxu0 %v362
        %935 = vmatpush.msra.mxu0 %v356
        %936 = vmatpush.msra.mxu0 %v350
        %937 = vmatpush.msra.mxu0 %v344
        %938 = vmatpush.msra.mxu0 %v338
        %939 = vmatpush.msra.mxu0 %v332
        %940 = vmatpush.msra.mxu0 %v326
        %941 = vmatpush.msra.mxu0 %v320
        %942 = vmatpush.msra.mxu0 %v314
        %943 = vmatpush.msra.mxu0 %v308
        %944 = vmatpush.msra.mxu0 %v302
        %945 = vmatpush.msra.mxu0 %v296
        %946 = vmatpush.msra.mxu0 %v290
        %947 = vmatpush.msra.mxu0 %v284
        %948 = vmatpush.msra.mxu0 %v278
        %949 = vmatpush.msra.mxu0 %v272
        %950 = vmatmul.f32.gmra.mxu0 %v251
        %v951 = vpop.f32.mrf.mxu0
        %v952 = vadd.f32 0.0, %v951
        %953 = vmatmul.f32.gmra.mxu0 %v253
        %v954 = vpop.f32.mrf.mxu0
        %v955 = vadd.f32 0.0, %v954
        %956 = vmatmul.f32.gmra.mxu0 %v255
        %v957 = vpop.f32.mrf.mxu0
        %v958 = vadd.f32 0.0, %v957
        %959 = vmatmul.f32.gmra.mxu0 %v257
        %v960 = vpop.f32.mrf.mxu0
        %v961 = vadd.f32 0.0, %v960
        %962 = vmatmul.f32.gmra.mxu0 %v259
        %v963 = vpop.f32.mrf.mxu0
        %v964 = vadd.f32 0.0, %v963
        %965 = vmatmul.f32.gmra.mxu0 %v261
        %v966 = vpop.f32.mrf.mxu0
        %v967 = vadd.f32 0.0, %v966
        %968 = vmatmul.f32.gmra.mxu0 %v263
        %v969 = vpop.f32.mrf.mxu0
        %v970 = vadd.f32 0.0, %v969
        %971 = vmatmul.f32.gmra.mxu0 %v265
        %v972 = vpop.f32.mrf.mxu0
        %v973 = vadd.f32 0.0, %v972
        %974 = vdwg.mxu0
        %975 = vmatpush.msra.mxu0 %v458
        %976 = vmatpush.msra.mxu0 %v452
        %977 = vmatpush.msra.mxu0 %v446
        %978 = vmatpush.msra.mxu0 %v440
        %979 = vmatpush.msra.mxu0 %v434
        %980 = vmatpush.msra.mxu0 %v428
        %981 = vmatpush.msra.mxu0 %v422
        %982 = vmatpush.msra.mxu0 %v416
        %983 = vmatpush.msra.mxu0 %v410
        %984 = vmatpush.msra.mxu0 %v404
        %985 = vmatpush.msra.mxu0 %v398
        %986 = vmatpush.msra.mxu0 %v392
        %987 = vmatpush.msra.mxu0 %v386
        %988 = vmatpush.msra.mxu0 %v380
        %989 = vmatpush.msra.mxu0 %v374
        %990 = vmatpush.msra.mxu0 %v368
        %991 = vmatmul.f32.gmra.mxu0 %v252
        %v992 = vpop.f32.mrf.mxu0
        %v993 = vadd.f32 %v952, %v992
        %994 = vmatmul.f32.gmra.mxu0 %v254
        %v995 = vpop.f32.mrf.mxu0
        %v996 = vadd.f32 %v955, %v995
        %997 = vmatmul.f32.gmra.mxu0 %v256
        %v998 = vpop.f32.mrf.mxu0
        %v999 = vadd.f32 %v958, %v998
        %1000 = vmatmul.f32.gmra.mxu0 %v258
        %v1001 = vpop.f32.mrf.mxu0
        %v1002 = vadd.f32 %v961, %v1001
        %1003 = vmatmul.f32.gmra.mxu0 %v260
        %v1004 = vpop.f32.mrf.mxu0
        %v1005 = vadd.f32 %v964, %v1004
        %1006 = vmatmul.f32.gmra.mxu0 %v262
        %v1007 = vpop.f32.mrf.mxu0
        %v1008 = vadd.f32 %v967, %v1007
        %1009 = vmatmul.f32.gmra.mxu0 %v264
        %v1010 = vpop.f32.mrf.mxu0
        %v1011 = vadd.f32 %v970, %v1010
        %1012 = vmatmul.f32.gmra.mxu0 %v266
        %v1013 = vpop.f32.mrf.mxu0
        %v1014 = vadd.f32 %v973, %v1013
        %1015 = vdwg.mxu0
        %v1016 = vlaneseq
        %v1017 = vshrl.u32 %v1016, 7
        %v1018 = vadd.s32 %v1017, 8
        %v1019 = vadd.s32 %v1017, 16
        %v1020 = vadd.s32 %v1017, 24
        %v1021 = vadd.s32 %v1017, 32
        %v1022 = vadd.s32 %v1017, 40
        %v1023 = vadd.s32 %v1017, 48
        %v1024 = vadd.s32 %v1017, 56
        %v1025 = vlaneseq
        %v1026 = vand.u32 %v1025, 127
        %vm1027 = vcmp.le.s32.totalorder %v1026, %v1017
        %vm1028 = vcmp.le.s32.totalorder %v1026, %v1018
        %vm1029 = vcmp.le.s32.totalorder %v1026, %v1019
        %vm1030 = vcmp.le.s32.totalorder %v1026, %v1020
        %vm1031 = vcmp.le.s32.totalorder %v1026, %v1021
        %vm1032 = vcmp.le.s32.totalorder %v1026, %v1022
        %vm1033 = vcmp.le.s32.totalorder %v1026, %v1023
        %vm1034 = vcmp.le.s32.totalorder %v1026, %v1024
        %vm1035 = vcmask 523264
        %v1037 = vsel %vm1035, %v583, 0
        %v1040 = vsel %vm1035, %v586, 0
        %v1043 = vsel %vm1035, %v589, 0
        %v1046 = vsel %vm1035, %v592, 0
        %v1049 = vsel %vm1035, %v595, 0
        %v1052 = vsel %vm1035, %v598, 0
        %v1055 = vsel %vm1035, %v601, 0
        %v1058 = vsel %vm1035, %v604, 0
        %v1061 = vsel %vm1035, %v747, 0
        %v1064 = vsel %vm1035, %v750, 0
        %v1067 = vsel %vm1035, %v753, 0
        %v1070 = vsel %vm1035, %v756, 0
        %v1073 = vsel %vm1035, %v759, 0
        %v1076 = vsel %vm1035, %v762, 0
        %v1079 = vsel %vm1035, %v765, 0
        %v1082 = vsel %vm1035, %v768, 0
        %1084 = vmatpush.xpose.msra.mxu0 0.0
        %1085 = vmatpush.xpose.msra.mxu0 0.0
        %1086 = vmatpush.xpose.msra.mxu0 0.0
        %1087 = vmatpush.xpose.msra.mxu0 0.0
        %1088 = vmatpush.xpose.msra.mxu0 0.0
        %1089 = vmatpush.xpose.msra.mxu0 0.0
        %1090 = vmatpush.xpose.msra.mxu0 0.0
        %1091 = vmatpush.xpose.msra.mxu0 0.0
        %1092 = vmatpush.xpose.msra.mxu0 %v1082
        %1093 = vmatpush.xpose.msra.mxu0 %v1079
        %1094 = vmatpush.xpose.msra.mxu0 %v1076
        %1095 = vmatpush.xpose.msra.mxu0 %v1073
        %1096 = vmatpush.xpose.msra.mxu0 %v1070
        %1097 = vmatpush.xpose.msra.mxu0 %v1067
        %1098 = vmatpush.xpose.msra.mxu0 %v1064
        %1099 = vmatpush.xpose.msra.mxu0 %v1061
        %1100 = vmatmul.f32.gmra.mxu0 %v1037
        %v1101 = vpop.f32.mrf.mxu0
        %v1102 = vadd.f32 0.0, %v1101
        %1103 = vmatmul.f32.gmra.mxu0 %v1040
        %v1104 = vpop.f32.mrf.mxu0
        %v1105 = vadd.f32 0.0, %v1104
        %1106 = vmatmul.f32.gmra.mxu0 %v1043
        %v1107 = vpop.f32.mrf.mxu0
        %v1108 = vadd.f32 0.0, %v1107
        %1109 = vmatmul.f32.gmra.mxu0 %v1046
        %v1110 = vpop.f32.mrf.mxu0
        %v1111 = vadd.f32 0.0, %v1110
        %1112 = vmatmul.f32.gmra.mxu0 %v1049
        %v1113 = vpop.f32.mrf.mxu0
        %v1114 = vadd.f32 0.0, %v1113
        %1115 = vmatmul.f32.gmra.mxu0 %v1052
        %v1116 = vpop.f32.mrf.mxu0
        %v1117 = vadd.f32 0.0, %v1116
        %1118 = vmatmul.f32.gmra.mxu0 %v1055
        %v1119 = vpop.f32.mrf.mxu0
        %v1120 = vadd.f32 0.0, %v1119
        %1121 = vmatmul.f32.gmra.mxu0 %v1058
        %v1122 = vpop.f32.mrf.mxu0
        %v1123 = vadd.f32 0.0, %v1122
        %1124 = vdwg.mxu0
        %v1125 = vsel %vm1027, %v1102, -inf
        %v1126 = vsel %vm1028, %v1105, -inf
        %v1127 = vsel %vm1029, %v1108, -inf
        %v1128 = vsel %vm1030, %v1111, -inf
        %v1129 = vsel %vm1031, %v1114, -inf
        %v1130 = vsel %vm1032, %v1117, -inf
        %v1131 = vsel %vm1033, %v1120, -inf
        %v1132 = vsel %vm1034, %v1123, -inf
        %v1133 = vsel %vm1035, %v1125, -inf
        %1134 = vmax.xlane.f32.xlu0 %v1133
        %v1135 = vpop.xlane.xlu0 %1134
        %v1136 = vsel %vm1035, %v1126, -inf
        %1137 = vmax.xlane.f32.xlu0 %v1136
        %v1138 = vpop.xlane.xlu0 %1137
        %v1139 = vsel %vm1035, %v1127, -inf
        %1140 = vmax.xlane.f32.xlu0 %v1139
        %v1141 = vpop.xlane.xlu0 %1140
        %v1142 = vsel %vm1035, %v1128, -inf
        %1143 = vmax.xlane.f32.xlu0 %v1142
        %v1144 = vpop.xlane.xlu0 %1143
        %v1145 = vsel %vm1035, %v1129, -inf
        %1146 = vmax.xlane.f32.xlu0 %v1145
        %v1147 = vpop.xlane.xlu0 %1146
        %v1148 = vsel %vm1035, %v1130, -inf
        %1149 = vmax.xlane.f32.xlu0 %v1148
        %v1150 = vpop.xlane.xlu0 %1149
        %v1151 = vsel %vm1035, %v1131, -inf
        %1152 = vmax.xlane.f32.xlu0 %v1151
        %v1153 = vpop.xlane.xlu0 %1152
        %v1154 = vsel %vm1035, %v1132, -inf
        %1155 = vmax.xlane.f32.xlu0 %v1154
        %v1156 = vpop.xlane.xlu0 %1155
        %v1157 = vsub.f32 %v1125, %v1135
        %v1158 = vsub.f32 %v1126, %v1138
        %v1159 = vsub.f32 %v1127, %v1141
        %v1160 = vsub.f32 %v1128, %v1144
        %v1161 = vsub.f32 %v1129, %v1147
        %v1162 = vsub.f32 %v1130, %v1150
        %v1163 = vsub.f32 %v1131, %v1153
        %v1164 = vsub.f32 %v1132, %v1156
        %v1165 = vmul.f32 %v1157, 1.442695
        %v1166 = vpow.pop %v1165
        %v1167 = vmul.f32 %v1158, 1.442695
        %v1168 = vpow.pop %v1167
        %v1169 = vmul.f32 %v1159, 1.442695
        %v1170 = vpow.pop %v1169
        %v1171 = vmul.f32 %v1160, 1.442695
        %v1172 = vpow.pop %v1171
        %v1173 = vmul.f32 %v1161, 1.442695
        %v1174 = vpow.pop %v1173
        %v1175 = vmul.f32 %v1162, 1.442695
        %v1176 = vpow.pop %v1175
        %v1177 = vmul.f32 %v1163, 1.442695
        %v1178 = vpow.pop %v1177
        %v1179 = vmul.f32 %v1164, 1.442695
        %v1180 = vpow.pop %v1179
        %v1181 = vsel %vm1035, %v1166, 0.0
        %1182 = vadd.xlane.f32.xlu0 %v1181
        %v1183 = vpop.xlane.xlu0 %1182
        %v1184 = vsel %vm1035, %v1168, 0.0
        %1185 = vadd.xlane.f32.xlu0 %v1184
        %v1186 = vpop.xlane.xlu0 %1185
        %v1187 = vsel %vm1035, %v1170, 0.0
        %1188 = vadd.xlane.f32.xlu0 %v1187
        %v1189 = vpop.xlane.xlu0 %1188
        %v1190 = vsel %vm1035, %v1172, 0.0
        %1191 = vadd.xlane.f32.xlu0 %v1190
        %v1192 = vpop.xlane.xlu0 %1191
        %v1193 = vsel %vm1035, %v1174, 0.0
        %1194 = vadd.xlane.f32.xlu0 %v1193
        %v1195 = vpop.xlane.xlu0 %1194
        %v1196 = vsel %vm1035, %v1176, 0.0
        %1197 = vadd.xlane.f32.xlu0 %v1196
        %v1198 = vpop.xlane.xlu0 %1197
        %v1199 = vsel %vm1035, %v1178, 0.0
        %1200 = vadd.xlane.f32.xlu0 %v1199
        %v1201 = vpop.xlane.xlu0 %1200
        %v1202 = vsel %vm1035, %v1180, 0.0
        %1203 = vadd.xlane.f32.xlu0 %v1202
        %v1204 = vpop.xlane.xlu0 %1203
        %v1205 = vrcp.pop %v1183
        %v1206 = vrcp.pop %v1186
        %v1207 = vrcp.pop %v1189
        %v1208 = vrcp.pop %v1192
        %v1209 = vrcp.pop %v1195
        %v1210 = vrcp.pop %v1198
        %v1211 = vrcp.pop %v1201
        %v1212 = vrcp.pop %v1204
        %v1213 = vmul.f32 %v1166, %v1205
        %v1214 = vmul.f32 %v1168, %v1206
        %v1215 = vmul.f32 %v1170, %v1207
        %v1216 = vmul.f32 %v1172, %v1208
        %v1217 = vmul.f32 %v1174, %v1209
        %v1218 = vmul.f32 %v1176, %v1210
        %v1219 = vmul.f32 %v1178, %v1211
        %v1220 = vmul.f32 %v1180, %v1212
        %v1222 = vsel %vm1035, %v1213, 0
        %v1225 = vsel %vm1035, %v1214, 0
        %v1228 = vsel %vm1035, %v1215, 0
        %v1231 = vsel %vm1035, %v1216, 0
        %v1234 = vsel %vm1035, %v1217, 0
        %v1237 = vsel %vm1035, %v1218, 0
        %v1240 = vsel %vm1035, %v1219, 0
        %v1243 = vsel %vm1035, %v1220, 0
        %1245 = vmatpush.msra.mxu0 0.0
        %1246 = vmatpush.msra.mxu0 0.0
        %1247 = vmatpush.msra.mxu0 0.0
        %1248 = vmatpush.msra.mxu0 0.0
        %1249 = vmatpush.msra.mxu0 0.0
        %1250 = vmatpush.msra.mxu0 0.0
        %1251 = vmatpush.msra.mxu0 0.0
        %1252 = vmatpush.msra.mxu0 0.0
        %1253 = vmatpush.msra.mxu0 %v932
        %1254 = vmatpush.msra.mxu0 %v929
        %1255 = vmatpush.msra.mxu0 %v926
        %1256 = vmatpush.msra.mxu0 %v923
        %1257 = vmatpush.msra.mxu0 %v920
        %1258 = vmatpush.msra.mxu0 %v917
        %1259 = vmatpush.msra.mxu0 %v914
        %1260 = vmatpush.msra.mxu0 %v911
        %1261 = vmatmul.f32.gmra.mxu0 %v1222
        %v1262 = vpop.f32.mrf.mxu0
        %v1263 = vadd.f32 0.0, %v1262
        %1264 = vmatmul.f32.gmra.mxu0 %v1225
        %v1265 = vpop.f32.mrf.mxu0
        %v1266 = vadd.f32 0.0, %v1265
        %1267 = vmatmul.f32.gmra.mxu0 %v1228
        %v1268 = vpop.f32.mrf.mxu0
        %v1269 = vadd.f32 0.0, %v1268
        %1270 = vmatmul.f32.gmra.mxu0 %v1231
        %v1271 = vpop.f32.mrf.mxu0
        %v1272 = vadd.f32 0.0, %v1271
        %1273 = vmatmul.f32.gmra.mxu0 %v1234
        %v1274 = vpop.f32.mrf.mxu0
        %v1275 = vadd.f32 0.0, %v1274
        %1276 = vmatmul.f32.gmra.mxu0 %v1237
        %v1277 = vpop.f32.mrf.mxu0
        %v1278 = vadd.f32 0.0, %v1277
        %1279 = vmatmul.f32.gmra.mxu0 %v1240
        %v1280 = vpop.f32.mrf.mxu0
        %v1281 = vadd.f32 0.0, %v1280
        %1282 = vmatmul.f32.gmra.mxu0 %v1243
        %v1283 = vpop.f32.mrf.mxu0
        %v1284 = vadd.f32 0.0, %v1283
        %1285 = vdwg.mxu0
        %1286 = vrot.lane.b32.xlu0 %v583, 64
        %v1287 = vpop.permute.xlu0 %1286
        %1288 = vrot.lane.b32.xlu0 %v586, 64
        %v1289 = vpop.permute.xlu0 %1288
        %1290 = vrot.lane.b32.xlu0 %v589, 64
        %v1291 = vpop.permute.xlu0 %1290
        %1292 = vrot.lane.b32.xlu0 %v592, 64
        %v1293 = vpop.permute.xlu0 %1292
        %1294 = vrot.lane.b32.xlu0 %v595, 64
        %v1295 = vpop.permute.xlu0 %1294
        %1296 = vrot.lane.b32.xlu0 %v598, 64
        %v1297 = vpop.permute.xlu0 %1296
        %1298 = vrot.lane.b32.xlu0 %v601, 64
        %v1299 = vpop.permute.xlu0 %1298
        %1300 = vrot.lane.b32.xlu0 %v604, 64
        %v1301 = vpop.permute.xlu0 %1300
        %1302 = vrot.lane.b32.xlu0 %v747, 64
        %v1303 = vpop.permute.xlu0 %1302
        %1304 = vrot.lane.b32.xlu0 %v750, 64
        %v1305 = vpop.permute.xlu0 %1304
        %1306 = vrot.lane.b32.xlu0 %v753, 64
        %v1307 = vpop.permute.xlu0 %1306
        %1308 = vrot.lane.b32.xlu0 %v756, 64
        %v1309 = vpop.permute.xlu0 %1308
        %1310 = vrot.lane.b32.xlu0 %v759, 64
        %v1311 = vpop.permute.xlu0 %1310
        %1312 = vrot.lane.b32.xlu0 %v762, 64
        %v1313 = vpop.permute.xlu0 %1312
        %1314 = vrot.lane.b32.xlu0 %v765, 64
        %v1315 = vpop.permute.xlu0 %1314
        %1316 = vrot.lane.b32.xlu0 %v768, 64
        %v1317 = vpop.permute.xlu0 %1316
        %v1318 = vsel %vm1035, %v1287, 0
        %v1320 = vsel %vm1035, %v1289, 0
        %v1322 = vsel %vm1035, %v1291, 0
        %v1324 = vsel %vm1035, %v1293, 0
        %v1326 = vsel %vm1035, %v1295, 0
        %v1328 = vsel %vm1035, %v1297, 0
        %v1330 = vsel %vm1035, %v1299, 0
        %v1332 = vsel %vm1035, %v1301, 0
        %v1334 = vsel %vm1035, %v1303, 0
        %v1336 = vsel %vm1035, %v1305, 0
        %v1338 = vsel %vm1035, %v1307, 0
        %v1340 = vsel %vm1035, %v1309, 0
        %v1342 = vsel %vm1035, %v1311, 0
        %v1344 = vsel %vm1035, %v1313, 0
        %v1346 = vsel %vm1035, %v1315, 0
        %v1348 = vsel %vm1035, %v1317, 0
        %1350 = vmatpush.xpose.msra.mxu0 0.0
        %1351 = vmatpush.xpose.msra.mxu0 0.0
        %1352 = vmatpush.xpose.msra.mxu0 0.0
        %1353 = vmatpush.xpose.msra.mxu0 0.0
        %1354 = vmatpush.xpose.msra.mxu0 0.0
        %1355 = vmatpush.xpose.msra.mxu0 0.0
        %1356 = vmatpush.xpose.msra.mxu0 0.0
        %1357 = vmatpush.xpose.msra.mxu0 0.0
        %1358 = vmatpush.xpose.msra.mxu0 %v1348
        %1359 = vmatpush.xpose.msra.mxu0 %v1346
        %1360 = vmatpush.xpose.msra.mxu0 %v1344
        %1361 = vmatpush.xpose.msra.mxu0 %v1342
        %1362 = vmatpush.xpose.msra.mxu0 %v1340
        %1363 = vmatpush.xpose.msra.mxu0 %v1338
        %1364 = vmatpush.xpose.msra.mxu0 %v1336
        %1365 = vmatpush.xpose.msra.mxu0 %v1334
        %1366 = vmatmul.f32.gmra.mxu0 %v1318
        %v1367 = vpop.f32.mrf.mxu0
        %v1368 = vadd.f32 0.0, %v1367
        %1369 = vmatmul.f32.gmra.mxu0 %v1320
        %v1370 = vpop.f32.mrf.mxu0
        %v1371 = vadd.f32 0.0, %v1370
        %1372 = vmatmul.f32.gmra.mxu0 %v1322
        %v1373 = vpop.f32.mrf.mxu0
        %v1374 = vadd.f32 0.0, %v1373
        %1375 = vmatmul.f32.gmra.mxu0 %v1324
        %v1376 = vpop.f32.mrf.mxu0
        %v1377 = vadd.f32 0.0, %v1376
        %1378 = vmatmul.f32.gmra.mxu0 %v1326
        %v1379 = vpop.f32.mrf.mxu0
        %v1380 = vadd.f32 0.0, %v1379
        %1381 = vmatmul.f32.gmra.mxu0 %v1328
        %v1382 = vpop.f32.mrf.mxu0
        %v1383 = vadd.f32 0.0, %v1382
        %1384 = vmatmul.f32.gmra.mxu0 %v1330
        %v1385 = vpop.f32.mrf.mxu0
        %v1386 = vadd.f32 0.0, %v1385
        %1387 = vmatmul.f32.gmra.mxu0 %v1332
        %v1388 = vpop.f32.mrf.mxu0
        %v1389 = vadd.f32 0.0, %v1388
        %1390 = vdwg.mxu0
        %v1391 = vsel %vm1027, %v1368, -inf
        %v1392 = vsel %vm1028, %v1371, -inf
        %v1393 = vsel %vm1029, %v1374, -inf
        %v1394 = vsel %vm1030, %v1377, -inf
        %v1395 = vsel %vm1031, %v1380, -inf
        %v1396 = vsel %vm1032, %v1383, -inf
        %v1397 = vsel %vm1033, %v1386, -inf
        %v1398 = vsel %vm1034, %v1389, -inf
        %v1399 = vsel %vm1035, %v1391, -inf
        %1400 = vmax.xlane.f32.xlu0 %v1399
        %v1401 = vpop.xlane.xlu0 %1400
        %v1402 = vsel %vm1035, %v1392, -inf
        %1403 = vmax.xlane.f32.xlu0 %v1402
        %v1404 = vpop.xlane.xlu0 %1403
        %v1405 = vsel %vm1035, %v1393, -inf
        %1406 = vmax.xlane.f32.xlu0 %v1405
        %v1407 = vpop.xlane.xlu0 %1406
        %v1408 = vsel %vm1035, %v1394, -inf
        %1409 = vmax.xlane.f32.xlu0 %v1408
        %v1410 = vpop.xlane.xlu0 %1409
        %v1411 = vsel %vm1035, %v1395, -inf
        %1412 = vmax.xlane.f32.xlu0 %v1411
        %v1413 = vpop.xlane.xlu0 %1412
        %v1414 = vsel %vm1035, %v1396, -inf
        %1415 = vmax.xlane.f32.xlu0 %v1414
        %v1416 = vpop.xlane.xlu0 %1415
        %v1417 = vsel %vm1035, %v1397, -inf
        %1418 = vmax.xlane.f32.xlu0 %v1417
        %v1419 = vpop.xlane.xlu0 %1418
        %v1420 = vsel %vm1035, %v1398, -inf
        %1421 = vmax.xlane.f32.xlu0 %v1420
        %v1422 = vpop.xlane.xlu0 %1421
        %v1423 = vsub.f32 %v1391, %v1401
        %v1424 = vsub.f32 %v1392, %v1404
        %v1425 = vsub.f32 %v1393, %v1407
        %v1426 = vsub.f32 %v1394, %v1410
        %v1427 = vsub.f32 %v1395, %v1413
        %v1428 = vsub.f32 %v1396, %v1416
        %v1429 = vsub.f32 %v1397, %v1419
        %v1430 = vsub.f32 %v1398, %v1422
        %v1431 = vmul.f32 %v1423, 1.442695
        %v1432 = vpow.pop %v1431
        %v1433 = vmul.f32 %v1424, 1.442695
        %v1434 = vpow.pop %v1433
        %v1435 = vmul.f32 %v1425, 1.442695
        %v1436 = vpow.pop %v1435
        %v1437 = vmul.f32 %v1426, 1.442695
        %v1438 = vpow.pop %v1437
        %v1439 = vmul.f32 %v1427, 1.442695
        %v1440 = vpow.pop %v1439
        %v1441 = vmul.f32 %v1428, 1.442695
        %v1442 = vpow.pop %v1441
        %v1443 = vmul.f32 %v1429, 1.442695
        %v1444 = vpow.pop %v1443
        %v1445 = vmul.f32 %v1430, 1.442695
        %v1446 = vpow.pop %v1445
        %v1447 = vsel %vm1035, %v1432, 0.0
        %1448 = vadd.xlane.f32.xlu0 %v1447
        %v1449 = vpop.xlane.xlu0 %1448
        %v1450 = vsel %vm1035, %v1434, 0.0
        %1451 = vadd.xlane.f32.xlu0 %v1450
        %v1452 = vpop.xlane.xlu0 %1451
        %v1453 = vsel %vm1035, %v1436, 0.0
        %1454 = vadd.xlane.f32.xlu0 %v1453
        %v1455 = vpop.xlane.xlu0 %1454
        %v1456 = vsel %vm1035, %v1438, 0.0
        %1457 = vadd.xlane.f32.xlu0 %v1456
        %v1458 = vpop.xlane.xlu0 %1457
        %v1459 = vsel %vm1035, %v1440, 0.0
        %1460 = vadd.xlane.f32.xlu0 %v1459
        %v1461 = vpop.xlane.xlu0 %1460
        %v1462 = vsel %vm1035, %v1442, 0.0
        %1463 = vadd.xlane.f32.xlu0 %v1462
        %v1464 = vpop.xlane.xlu0 %1463
        %v1465 = vsel %vm1035, %v1444, 0.0
        %1466 = vadd.xlane.f32.xlu0 %v1465
        %v1467 = vpop.xlane.xlu0 %1466
        %v1468 = vsel %vm1035, %v1446, 0.0
        %1469 = vadd.xlane.f32.xlu0 %v1468
        %v1470 = vpop.xlane.xlu0 %1469
        %v1471 = vrcp.pop %v1449
        %v1472 = vrcp.pop %v1452
        %v1473 = vrcp.pop %v1455
        %v1474 = vrcp.pop %v1458
        %v1475 = vrcp.pop %v1461
        %v1476 = vrcp.pop %v1464
        %v1477 = vrcp.pop %v1467
        %v1478 = vrcp.pop %v1470
        %v1479 = vmul.f32 %v1432, %v1471
        %v1480 = vmul.f32 %v1434, %v1472
        %v1481 = vmul.f32 %v1436, %v1473
        %v1482 = vmul.f32 %v1438, %v1474
        %v1483 = vmul.f32 %v1440, %v1475
        %v1484 = vmul.f32 %v1442, %v1476
        %v1485 = vmul.f32 %v1444, %v1477
        %v1486 = vmul.f32 %v1446, %v1478
        %1495 = vrot.lane.b32.xlu0 %v911, 64
        %v1496 = vpop.permute.xlu0 %1495
        %1497 = vrot.lane.b32.xlu0 %v914, 64
        %v1498 = vpop.permute.xlu0 %1497
        %1499 = vrot.lane.b32.xlu0 %v917, 64
        %v1500 = vpop.permute.xlu0 %1499
        %1501 = vrot.lane.b32.xlu0 %v920, 64
        %v1502 = vpop.permute.xlu0 %1501
        %1503 = vrot.lane.b32.xlu0 %v923, 64
        %v1504 = vpop.permute.xlu0 %1503
        %1505 = vrot.lane.b32.xlu0 %v926, 64
        %v1506 = vpop.permute.xlu0 %1505
        %1507 = vrot.lane.b32.xlu0 %v929, 64
        %v1508 = vpop.permute.xlu0 %1507
        %1509 = vrot.lane.b32.xlu0 %v932, 64
        %v1510 = vpop.permute.xlu0 %1509
        %v1520 = vsel %vm1035, %v1479, 0
        %v1523 = vsel %vm1035, %v1480, 0
        %v1526 = vsel %vm1035, %v1481, 0
        %v1529 = vsel %vm1035, %v1482, 0
        %v1532 = vsel %vm1035, %v1483, 0
        %v1535 = vsel %vm1035, %v1484, 0
        %v1538 = vsel %vm1035, %v1485, 0
        %v1541 = vsel %vm1035, %v1486, 0
        %1543 = vmatpush.msra.mxu0 0.0
        %1544 = vmatpush.msra.mxu0 0.0
        %1545 = vmatpush.msra.mxu0 0.0
        %1546 = vmatpush.msra.mxu0 0.0
        %1547 = vmatpush.msra.mxu0 0.0
        %1548 = vmatpush.msra.mxu0 0.0
        %1549 = vmatpush.msra.mxu0 0.0
        %1550 = vmatpush.msra.mxu0 0.0
        %1551 = vmatpush.msra.mxu0 %v1510
        %1552 = vmatpush.msra.mxu0 %v1508
        %1553 = vmatpush.msra.mxu0 %v1506
        %1554 = vmatpush.msra.mxu0 %v1504
        %1555 = vmatpush.msra.mxu0 %v1502
        %1556 = vmatpush.msra.mxu0 %v1500
        %1557 = vmatpush.msra.mxu0 %v1498
        %1558 = vmatpush.msra.mxu0 %v1496
        %1559 = vmatmul.f32.gmra.mxu0 %v1520
        %v1560 = vpop.f32.mrf.mxu0
        %v1561 = vadd.f32 0.0, %v1560
        %1562 = vmatmul.f32.gmra.mxu0 %v1523
        %v1563 = vpop.f32.mrf.mxu0
        %v1564 = vadd.f32 0.0, %v1563
        %1565 = vmatmul.f32.gmra.mxu0 %v1526
        %v1566 = vpop.f32.mrf.mxu0
        %v1567 = vadd.f32 0.0, %v1566
        %1568 = vmatmul.f32.gmra.mxu0 %v1529
        %v1569 = vpop.f32.mrf.mxu0
        %v1570 = vadd.f32 0.0, %v1569
        %1571 = vmatmul.f32.gmra.mxu0 %v1532
        %v1572 = vpop.f32.mrf.mxu0
        %v1573 = vadd.f32 0.0, %v1572
        %1574 = vmatmul.f32.gmra.mxu0 %v1535
        %v1575 = vpop.f32.mrf.mxu0
        %v1576 = vadd.f32 0.0, %v1575
        %1577 = vmatmul.f32.gmra.mxu0 %v1538
        %v1578 = vpop.f32.mrf.mxu0
        %v1579 = vadd.f32 0.0, %v1578
        %1580 = vmatmul.f32.gmra.mxu0 %v1541
        %v1581 = vpop.f32.mrf.mxu0
        %v1582 = vadd.f32 0.0, %v1581
        %1583 = vdwg.mxu0
        %v1585 = vsel %vm1035, %v1561, 0
        %v1588 = vsel %vm1035, %v1564, 0
        %v1591 = vsel %vm1035, %v1567, 0
        %v1594 = vsel %vm1035, %v1570, 0
        %v1597 = vsel %vm1035, %v1573, 0
        %v1600 = vsel %vm1035, %v1576, 0
        %v1603 = vsel %vm1035, %v1579, 0
        %v1606 = vsel %vm1035, %v1582, 0
        %1608 = vmatpush.msra.mxu0 0.0
        %1609 = vmatpush.msra.mxu0 0.0
        %1610 = vmatpush.msra.mxu0 0.0
        %1611 = vmatpush.msra.mxu0 0.0
        %1612 = vmatpush.msra.mxu0 0.0
        %1613 = vmatpush.msra.mxu0 0.0
        %1614 = vmatpush.msra.mxu0 0.0
        %1615 = vmatpush.msra.mxu0 0.0
        %1616 = vmatpush.msra.mxu0 %v489
        %1617 = vmatpush.msra.mxu0 %v487
        %1618 = vmatpush.msra.mxu0 %v485
        %1619 = vmatpush.msra.mxu0 %v483
        %1620 = vmatpush.msra.mxu0 %v481
        %1621 = vmatpush.msra.mxu0 %v479
        %1622 = vmatpush.msra.mxu0 %v477
        %1623 = vmatpush.msra.mxu0 %v475
        %1624 = vmatmul.f32.gmra.mxu0 %v1585
        %v1625 = vpop.f32.mrf.mxu0
        %v1626 = vadd.f32 0.0, %v1625
        %1627 = vmatmul.f32.gmra.mxu0 %v1588
        %v1628 = vpop.f32.mrf.mxu0
        %v1629 = vadd.f32 0.0, %v1628
        %1630 = vmatmul.f32.gmra.mxu0 %v1591
        %v1631 = vpop.f32.mrf.mxu0
        %v1632 = vadd.f32 0.0, %v1631
        %1633 = vmatmul.f32.gmra.mxu0 %v1594
        %v1634 = vpop.f32.mrf.mxu0
        %v1635 = vadd.f32 0.0, %v1634
        %1636 = vmatmul.f32.gmra.mxu0 %v1597
        %v1637 = vpop.f32.mrf.mxu0
        %v1638 = vadd.f32 0.0, %v1637
        %1639 = vmatmul.f32.gmra.mxu0 %v1600
        %v1640 = vpop.f32.mrf.mxu0
        %v1641 = vadd.f32 0.0, %v1640
        %1642 = vmatmul.f32.gmra.mxu0 %v1603
        %v1643 = vpop.f32.mrf.mxu0
        %v1644 = vadd.f32 0.0, %v1643
        %1645 = vmatmul.f32.gmra.mxu0 %v1606
        %v1646 = vpop.f32.mrf.mxu0
        %v1647 = vadd.f32 0.0, %v1646
        %1648 = vdwg.mxu0
        %1649 = vmatpush.msra.mxu0 0.0
        %1650 = vmatpush.msra.mxu0 0.0
        %1651 = vmatpush.msra.mxu0 0.0
        %1652 = vmatpush.msra.mxu0 0.0
        %1653 = vmatpush.msra.mxu0 0.0
        %1654 = vmatpush.msra.mxu0 0.0
        %1655 = vmatpush.msra.mxu0 0.0
        %1656 = vmatpush.msra.mxu0 0.0
        %1657 = vmatpush.msra.mxu0 %v490
        %1658 = vmatpush.msra.mxu0 %v488
        %1659 = vmatpush.msra.mxu0 %v486
        %1660 = vmatpush.msra.mxu0 %v484
        %1661 = vmatpush.msra.mxu0 %v482
        %1662 = vmatpush.msra.mxu0 %v480
        %1663 = vmatpush.msra.mxu0 %v478
        %1664 = vmatpush.msra.mxu0 %v476
        %1665 = vmatmul.f32.gmra.mxu0 %v1585
        %v1666 = vpop.f32.mrf.mxu0
        %v1667 = vadd.f32 0.0, %v1666
        %1668 = vmatmul.f32.gmra.mxu0 %v1588
        %v1669 = vpop.f32.mrf.mxu0
        %v1670 = vadd.f32 0.0, %v1669
        %1671 = vmatmul.f32.gmra.mxu0 %v1591
        %v1672 = vpop.f32.mrf.mxu0
        %v1673 = vadd.f32 0.0, %v1672
        %1674 = vmatmul.f32.gmra.mxu0 %v1594
        %v1675 = vpop.f32.mrf.mxu0
        %v1676 = vadd.f32 0.0, %v1675
        %1677 = vmatmul.f32.gmra.mxu0 %v1597
        %v1678 = vpop.f32.mrf.mxu0
        %v1679 = vadd.f32 0.0, %v1678
        %1680 = vmatmul.f32.gmra.mxu0 %v1600
        %v1681 = vpop.f32.mrf.mxu0
        %v1682 = vadd.f32 0.0, %v1681
        %1683 = vmatmul.f32.gmra.mxu0 %v1603
        %v1684 = vpop.f32.mrf.mxu0
        %v1685 = vadd.f32 0.0, %v1684
        %1686 = vmatmul.f32.gmra.mxu0 %v1606
        %v1687 = vpop.f32.mrf.mxu0
        %v1688 = vadd.f32 0.0, %v1687
        %1689 = vdwg.mxu0
        %v1691 = vsel %vm1035, %v1263, 0
        %v1694 = vsel %vm1035, %v1266, 0
        %v1697 = vsel %vm1035, %v1269, 0
        %v1700 = vsel %vm1035, %v1272, 0
        %v1703 = vsel %vm1035, %v1275, 0
        %v1706 = vsel %vm1035, %v1278, 0
        %v1709 = vsel %vm1035, %v1281, 0
        %v1712 = vsel %vm1035, %v1284, 0
        %1714 = vmatpush.msra.mxu0 0.0
        %1715 = vmatpush.msra.mxu0 0.0
        %1716 = vmatpush.msra.mxu0 0.0
        %1717 = vmatpush.msra.mxu0 0.0
        %1718 = vmatpush.msra.mxu0 0.0
        %1719 = vmatpush.msra.mxu0 0.0
        %1720 = vmatpush.msra.mxu0 0.0
        %1721 = vmatpush.msra.mxu0 0.0
        %1722 = vmatpush.msra.mxu0 %v473
        %1723 = vmatpush.msra.mxu0 %v471
        %1724 = vmatpush.msra.mxu0 %v469
        %1725 = vmatpush.msra.mxu0 %v467
        %1726 = vmatpush.msra.mxu0 %v465
        %1727 = vmatpush.msra.mxu0 %v463
        %1728 = vmatpush.msra.mxu0 %v461
        %1729 = vmatpush.msra.mxu0 %v459
        %1730 = vmatmul.f32.gmra.mxu0 %v1691
        %v1731 = vpop.f32.mrf.mxu0
        %v1732 = vadd.f32 %v1626, %v1731
        %1733 = vmatmul.f32.gmra.mxu0 %v1694
        %v1734 = vpop.f32.mrf.mxu0
        %v1735 = vadd.f32 %v1629, %v1734
        %1736 = vmatmul.f32.gmra.mxu0 %v1697
        %v1737 = vpop.f32.mrf.mxu0
        %v1738 = vadd.f32 %v1632, %v1737
        %1739 = vmatmul.f32.gmra.mxu0 %v1700
        %v1740 = vpop.f32.mrf.mxu0
        %v1741 = vadd.f32 %v1635, %v1740
        %1742 = vmatmul.f32.gmra.mxu0 %v1703
        %v1743 = vpop.f32.mrf.mxu0
        %v1744 = vadd.f32 %v1638, %v1743
        %1745 = vmatmul.f32.gmra.mxu0 %v1706
        %v1746 = vpop.f32.mrf.mxu0
        %v1747 = vadd.f32 %v1641, %v1746
        %1748 = vmatmul.f32.gmra.mxu0 %v1709
        %v1749 = vpop.f32.mrf.mxu0
        %v1750 = vadd.f32 %v1644, %v1749
        %1751 = vmatmul.f32.gmra.mxu0 %v1712
        %v1752 = vpop.f32.mrf.mxu0
        %v1753 = vadd.f32 %v1647, %v1752
        %1754 = vdwg.mxu0
        %1755 = vmatpush.msra.mxu0 0.0
        %1756 = vmatpush.msra.mxu0 0.0
        %1757 = vmatpush.msra.mxu0 0.0
        %1758 = vmatpush.msra.mxu0 0.0
        %1759 = vmatpush.msra.mxu0 0.0
        %1760 = vmatpush.msra.mxu0 0.0
        %1761 = vmatpush.msra.mxu0 0.0
        %1762 = vmatpush.msra.mxu0 0.0
        %1763 = vmatpush.msra.mxu0 %v474
        %1764 = vmatpush.msra.mxu0 %v472
        %1765 = vmatpush.msra.mxu0 %v470
        %1766 = vmatpush.msra.mxu0 %v468
        %1767 = vmatpush.msra.mxu0 %v466
        %1768 = vmatpush.msra.mxu0 %v464
        %1769 = vmatpush.msra.mxu0 %v462
        %1770 = vmatpush.msra.mxu0 %v460
        %1771 = vmatmul.f32.gmra.mxu0 %v1691
        %v1772 = vpop.f32.mrf.mxu0
        %v1773 = vadd.f32 %v1667, %v1772
        %1774 = vmatmul.f32.gmra.mxu0 %v1694
        %v1775 = vpop.f32.mrf.mxu0
        %v1776 = vadd.f32 %v1670, %v1775
        %1777 = vmatmul.f32.gmra.mxu0 %v1697
        %v1778 = vpop.f32.mrf.mxu0
        %v1779 = vadd.f32 %v1673, %v1778
        %1780 = vmatmul.f32.gmra.mxu0 %v1700
        %v1781 = vpop.f32.mrf.mxu0
        %v1782 = vadd.f32 %v1676, %v1781
        %1783 = vmatmul.f32.gmra.mxu0 %v1703
        %v1784 = vpop.f32.mrf.mxu0
        %v1785 = vadd.f32 %v1679, %v1784
        %1786 = vmatmul.f32.gmra.mxu0 %v1706
        %v1787 = vpop.f32.mrf.mxu0
        %v1788 = vadd.f32 %v1682, %v1787
        %1789 = vmatmul.f32.gmra.mxu0 %v1709
        %v1790 = vpop.f32.mrf.mxu0
        %v1791 = vadd.f32 %v1685, %v1790
        %1792 = vmatmul.f32.gmra.mxu0 %v1712
        %v1793 = vpop.f32.mrf.mxu0
        %v1794 = vadd.f32 %v1688, %v1793
        %1795 = vdwg.mxu0
        %v1797 = vsel %vm1035, %v665, 0
        %v1800 = vsel %vm1035, %v668, 0
        %v1803 = vsel %vm1035, %v671, 0
        %v1806 = vsel %vm1035, %v674, 0
        %v1809 = vsel %vm1035, %v677, 0
        %v1812 = vsel %vm1035, %v680, 0
        %v1815 = vsel %vm1035, %v683, 0
        %v1818 = vsel %vm1035, %v686, 0
        %v1821 = vsel %vm1035, %v829, 0
        %v1824 = vsel %vm1035, %v832, 0
        %v1827 = vsel %vm1035, %v835, 0
        %v1830 = vsel %vm1035, %v838, 0
        %v1833 = vsel %vm1035, %v841, 0
        %v1836 = vsel %vm1035, %v844, 0
        %v1839 = vsel %vm1035, %v847, 0
        %v1842 = vsel %vm1035, %v850, 0
        %1844 = vmatpush.xpose.msra.mxu0 0.0
        %1845 = vmatpush.xpose.msra.mxu0 0.0
        %1846 = vmatpush.xpose.msra.mxu0 0.0
        %1847 = vmatpush.xpose.msra.mxu0 0.0
        %1848 = vmatpush.xpose.msra.mxu0 0.0
        %1849 = vmatpush.xpose.msra.mxu0 0.0
        %1850 = vmatpush.xpose.msra.mxu0 0.0
        %1851 = vmatpush.xpose.msra.mxu0 0.0
        %1852 = vmatpush.xpose.msra.mxu0 %v1842
        %1853 = vmatpush.xpose.msra.mxu0 %v1839
        %1854 = vmatpush.xpose.msra.mxu0 %v1836
        %1855 = vmatpush.xpose.msra.mxu0 %v1833
        %1856 = vmatpush.xpose.msra.mxu0 %v1830
        %1857 = vmatpush.xpose.msra.mxu0 %v1827
        %1858 = vmatpush.xpose.msra.mxu0 %v1824
        %1859 = vmatpush.xpose.msra.mxu0 %v1821
        %1860 = vmatmul.f32.gmra.mxu0 %v1797
        %v1861 = vpop.f32.mrf.mxu0
        %v1862 = vadd.f32 0.0, %v1861
        %1863 = vmatmul.f32.gmra.mxu0 %v1800
        %v1864 = vpop.f32.mrf.mxu0
        %v1865 = vadd.f32 0.0, %v1864
        %1866 = vmatmul.f32.gmra.mxu0 %v1803
        %v1867 = vpop.f32.mrf.mxu0
        %v1868 = vadd.f32 0.0, %v1867
        %1869 = vmatmul.f32.gmra.mxu0 %v1806
        %v1870 = vpop.f32.mrf.mxu0
        %v1871 = vadd.f32 0.0, %v1870
        %1872 = vmatmul.f32.gmra.mxu0 %v1809
        %v1873 = vpop.f32.mrf.mxu0
        %v1874 = vadd.f32 0.0, %v1873
        %1875 = vmatmul.f32.gmra.mxu0 %v1812
        %v1876 = vpop.f32.mrf.mxu0
        %v1877 = vadd.f32 0.0, %v1876
        %1878 = vmatmul.f32.gmra.mxu0 %v1815
        %v1879 = vpop.f32.mrf.mxu0
        %v1880 = vadd.f32 0.0, %v1879
        %1881 = vmatmul.f32.gmra.mxu0 %v1818
        %v1882 = vpop.f32.mrf.mxu0
        %v1883 = vadd.f32 0.0, %v1882
        %1884 = vdwg.mxu0
        %v1885 = vsel %vm1027, %v1862, -inf
        %v1886 = vsel %vm1028, %v1865, -inf
        %v1887 = vsel %vm1029, %v1868, -inf
        %v1888 = vsel %vm1030, %v1871, -inf
        %v1889 = vsel %vm1031, %v1874, -inf
        %v1890 = vsel %vm1032, %v1877, -inf
        %v1891 = vsel %vm1033, %v1880, -inf
        %v1892 = vsel %vm1034, %v1883, -inf
        %v1893 = vsel %vm1035, %v1885, -inf
        %1894 = vmax.xlane.f32.xlu0 %v1893
        %v1895 = vpop.xlane.xlu0 %1894
        %v1896 = vsel %vm1035, %v1886, -inf
        %1897 = vmax.xlane.f32.xlu0 %v1896
        %v1898 = vpop.xlane.xlu0 %1897
        %v1899 = vsel %vm1035, %v1887, -inf
        %1900 = vmax.xlane.f32.xlu0 %v1899
        %v1901 = vpop.xlane.xlu0 %1900
        %v1902 = vsel %vm1035, %v1888, -inf
        %1903 = vmax.xlane.f32.xlu0 %v1902
        %v1904 = vpop.xlane.xlu0 %1903
        %v1905 = vsel %vm1035, %v1889, -inf
        %1906 = vmax.xlane.f32.xlu0 %v1905
        %v1907 = vpop.xlane.xlu0 %1906
        %v1908 = vsel %vm1035, %v1890, -inf
        %1909 = vmax.xlane.f32.xlu0 %v1908
        %v1910 = vpop.xlane.xlu0 %1909
        %v1911 = vsel %vm1035, %v1891, -inf
        %1912 = vmax.xlane.f32.xlu0 %v1911
        %v1913 = vpop.xlane.xlu0 %1912
        %v1914 = vsel %vm1035, %v1892, -inf
        %1915 = vmax.xlane.f32.xlu0 %v1914
        %v1916 = vpop.xlane.xlu0 %1915
        %v1917 = vsub.f32 %v1885, %v1895
        %v1918 = vsub.f32 %v1886, %v1898
        %v1919 = vsub.f32 %v1887, %v1901
        %v1920 = vsub.f32 %v1888, %v1904
        %v1921 = vsub.f32 %v1889, %v1907
        %v1922 = vsub.f32 %v1890, %v1910
        %v1923 = vsub.f32 %v1891, %v1913
        %v1924 = vsub.f32 %v1892, %v1916
        %v1925 = vmul.f32 %v1917, 1.442695
        %v1926 = vpow.pop %v1925
        %v1927 = vmul.f32 %v1918, 1.442695
        %v1928 = vpow.pop %v1927
        %v1929 = vmul.f32 %v1919, 1.442695
        %v1930 = vpow.pop %v1929
        %v1931 = vmul.f32 %v1920, 1.442695
        %v1932 = vpow.pop %v1931
        %v1933 = vmul.f32 %v1921, 1.442695
        %v1934 = vpow.pop %v1933
        %v1935 = vmul.f32 %v1922, 1.442695
        %v1936 = vpow.pop %v1935
        %v1937 = vmul.f32 %v1923, 1.442695
        %v1938 = vpow.pop %v1937
        %v1939 = vmul.f32 %v1924, 1.442695
        %v1940 = vpow.pop %v1939
        %v1941 = vsel %vm1035, %v1926, 0.0
        %1942 = vadd.xlane.f32.xlu0 %v1941
        %v1943 = vpop.xlane.xlu0 %1942
        %v1944 = vsel %vm1035, %v1928, 0.0
        %1945 = vadd.xlane.f32.xlu0 %v1944
        %v1946 = vpop.xlane.xlu0 %1945
        %v1947 = vsel %vm1035, %v1930, 0.0
        %1948 = vadd.xlane.f32.xlu0 %v1947
        %v1949 = vpop.xlane.xlu0 %1948
        %v1950 = vsel %vm1035, %v1932, 0.0
        %1951 = vadd.xlane.f32.xlu0 %v1950
        %v1952 = vpop.xlane.xlu0 %1951
        %v1953 = vsel %vm1035, %v1934, 0.0
        %1954 = vadd.xlane.f32.xlu0 %v1953
        %v1955 = vpop.xlane.xlu0 %1954
        %v1956 = vsel %vm1035, %v1936, 0.0
        %1957 = vadd.xlane.f32.xlu0 %v1956
        %v1958 = vpop.xlane.xlu0 %1957
        %v1959 = vsel %vm1035, %v1938, 0.0
        %1960 = vadd.xlane.f32.xlu0 %v1959
        %v1961 = vpop.xlane.xlu0 %1960
        %v1962 = vsel %vm1035, %v1940, 0.0
        %1963 = vadd.xlane.f32.xlu0 %v1962
        %v1964 = vpop.xlane.xlu0 %1963
        %v1965 = vrcp.pop %v1943
        %v1966 = vrcp.pop %v1946
        %v1967 = vrcp.pop %v1949
        %v1968 = vrcp.pop %v1952
        %v1969 = vrcp.pop %v1955
        %v1970 = vrcp.pop %v1958
        %v1971 = vrcp.pop %v1961
        %v1972 = vrcp.pop %v1964
        %v1973 = vmul.f32 %v1926, %v1965
        %v1974 = vmul.f32 %v1928, %v1966
        %v1975 = vmul.f32 %v1930, %v1967
        %v1976 = vmul.f32 %v1932, %v1968
        %v1977 = vmul.f32 %v1934, %v1969
        %v1978 = vmul.f32 %v1936, %v1970
        %v1979 = vmul.f32 %v1938, %v1971
        %v1980 = vmul.f32 %v1940, %v1972
        %v1982 = vsel %vm1035, %v1973, 0
        %v1985 = vsel %vm1035, %v1974, 0
        %v1988 = vsel %vm1035, %v1975, 0
        %v1991 = vsel %vm1035, %v1976, 0
        %v1994 = vsel %vm1035, %v1977, 0
        %v1997 = vsel %vm1035, %v1978, 0
        %v2000 = vsel %vm1035, %v1979, 0
        %v2003 = vsel %vm1035, %v1980, 0
        %2005 = vmatpush.msra.mxu0 0.0
        %2006 = vmatpush.msra.mxu0 0.0
        %2007 = vmatpush.msra.mxu0 0.0
        %2008 = vmatpush.msra.mxu0 0.0
        %2009 = vmatpush.msra.mxu0 0.0
        %2010 = vmatpush.msra.mxu0 0.0
        %2011 = vmatpush.msra.mxu0 0.0
        %2012 = vmatpush.msra.mxu0 0.0
        %2013 = vmatpush.msra.mxu0 %v1014
        %2014 = vmatpush.msra.mxu0 %v1011
        %2015 = vmatpush.msra.mxu0 %v1008
        %2016 = vmatpush.msra.mxu0 %v1005
        %2017 = vmatpush.msra.mxu0 %v1002
        %2018 = vmatpush.msra.mxu0 %v999
        %2019 = vmatpush.msra.mxu0 %v996
        %2020 = vmatpush.msra.mxu0 %v993
        %2021 = vmatmul.f32.gmra.mxu0 %v1982
        %v2022 = vpop.f32.mrf.mxu0
        %v2023 = vadd.f32 0.0, %v2022
        %2024 = vmatmul.f32.gmra.mxu0 %v1985
        %v2025 = vpop.f32.mrf.mxu0
        %v2026 = vadd.f32 0.0, %v2025
        %2027 = vmatmul.f32.gmra.mxu0 %v1988
        %v2028 = vpop.f32.mrf.mxu0
        %v2029 = vadd.f32 0.0, %v2028
        %2030 = vmatmul.f32.gmra.mxu0 %v1991
        %v2031 = vpop.f32.mrf.mxu0
        %v2032 = vadd.f32 0.0, %v2031
        %2033 = vmatmul.f32.gmra.mxu0 %v1994
        %v2034 = vpop.f32.mrf.mxu0
        %v2035 = vadd.f32 0.0, %v2034
        %2036 = vmatmul.f32.gmra.mxu0 %v1997
        %v2037 = vpop.f32.mrf.mxu0
        %v2038 = vadd.f32 0.0, %v2037
        %2039 = vmatmul.f32.gmra.mxu0 %v2000
        %v2040 = vpop.f32.mrf.mxu0
        %v2041 = vadd.f32 0.0, %v2040
        %2042 = vmatmul.f32.gmra.mxu0 %v2003
        %v2043 = vpop.f32.mrf.mxu0
        %v2044 = vadd.f32 0.0, %v2043
        %2045 = vdwg.mxu0
        %v2047 = vsel %vm1035, %v2023, 0
        %v2050 = vsel %vm1035, %v2026, 0
        %v2053 = vsel %vm1035, %v2029, 0
        %v2056 = vsel %vm1035, %v2032, 0
        %v2059 = vsel %vm1035, %v2035, 0
        %v2062 = vsel %vm1035, %v2038, 0
        %v2065 = vsel %vm1035, %v2041, 0
        %v2068 = vsel %vm1035, %v2044, 0
        %2070 = vmatpush.msra.mxu0 0.0
        %2071 = vmatpush.msra.mxu0 0.0
        %2072 = vmatpush.msra.mxu0 0.0
        %2073 = vmatpush.msra.mxu0 0.0
        %2074 = vmatpush.msra.mxu0 0.0
        %2075 = vmatpush.msra.mxu0 0.0
        %2076 = vmatpush.msra.mxu0 0.0
        %2077 = vmatpush.msra.mxu0 0.0
        %2078 = vmatpush.msra.mxu0 %v505
        %2079 = vmatpush.msra.mxu0 %v503
        %2080 = vmatpush.msra.mxu0 %v501
        %2081 = vmatpush.msra.mxu0 %v499
        %2082 = vmatpush.msra.mxu0 %v497
        %2083 = vmatpush.msra.mxu0 %v495
        %2084 = vmatpush.msra.mxu0 %v493
        %2085 = vmatpush.msra.mxu0 %v491
        %2086 = vmatmul.f32.gmra.mxu0 %v2047
        %v2087 = vpop.f32.mrf.mxu0
        %v2088 = vadd.f32 0.0, %v2087
        %2089 = vmatmul.f32.gmra.mxu0 %v2050
        %v2090 = vpop.f32.mrf.mxu0
        %v2091 = vadd.f32 0.0, %v2090
        %2092 = vmatmul.f32.gmra.mxu0 %v2053
        %v2093 = vpop.f32.mrf.mxu0
        %v2094 = vadd.f32 0.0, %v2093
        %2095 = vmatmul.f32.gmra.mxu0 %v2056
        %v2096 = vpop.f32.mrf.mxu0
        %v2097 = vadd.f32 0.0, %v2096
        %2098 = vmatmul.f32.gmra.mxu0 %v2059
        %v2099 = vpop.f32.mrf.mxu0
        %v2100 = vadd.f32 0.0, %v2099
        %2101 = vmatmul.f32.gmra.mxu0 %v2062
        %v2102 = vpop.f32.mrf.mxu0
        %v2103 = vadd.f32 0.0, %v2102
        %2104 = vmatmul.f32.gmra.mxu0 %v2065
        %v2105 = vpop.f32.mrf.mxu0
        %v2106 = vadd.f32 0.0, %v2105
        %2107 = vmatmul.f32.gmra.mxu0 %v2068
        %v2108 = vpop.f32.mrf.mxu0
        %v2109 = vadd.f32 0.0, %v2108
        %2110 = vdwg.mxu0
        %2111 = vmatpush.msra.mxu0 0.0
        %2112 = vmatpush.msra.mxu0 0.0
        %2113 = vmatpush.msra.mxu0 0.0
        %2114 = vmatpush.msra.mxu0 0.0
        %2115 = vmatpush.msra.mxu0 0.0
        %2116 = vmatpush.msra.mxu0 0.0
        %2117 = vmatpush.msra.mxu0 0.0
        %2118 = vmatpush.msra.mxu0 0.0
        %2119 = vmatpush.msra.mxu0 %v506
        %2120 = vmatpush.msra.mxu0 %v504
        %2121 = vmatpush.msra.mxu0 %v502
        %2122 = vmatpush.msra.mxu0 %v500
        %2123 = vmatpush.msra.mxu0 %v498
        %2124 = vmatpush.msra.mxu0 %v496
        %2125 = vmatpush.msra.mxu0 %v494
        %2126 = vmatpush.msra.mxu0 %v492
        %2127 = vmatmul.f32.gmra.mxu0 %v2047
        %v2128 = vpop.f32.mrf.mxu0
        %v2129 = vadd.f32 0.0, %v2128
        %2130 = vmatmul.f32.gmra.mxu0 %v2050
        %v2131 = vpop.f32.mrf.mxu0
        %v2132 = vadd.f32 0.0, %v2131
        %2133 = vmatmul.f32.gmra.mxu0 %v2053
        %v2134 = vpop.f32.mrf.mxu0
        %v2135 = vadd.f32 0.0, %v2134
        %2136 = vmatmul.f32.gmra.mxu0 %v2056
        %v2137 = vpop.f32.mrf.mxu0
        %v2138 = vadd.f32 0.0, %v2137
        %2139 = vmatmul.f32.gmra.mxu0 %v2059
        %v2140 = vpop.f32.mrf.mxu0
        %v2141 = vadd.f32 0.0, %v2140
        %2142 = vmatmul.f32.gmra.mxu0 %v2062
        %v2143 = vpop.f32.mrf.mxu0
        %v2144 = vadd.f32 0.0, %v2143
        %2145 = vmatmul.f32.gmra.mxu0 %v2065
        %v2146 = vpop.f32.mrf.mxu0
        %v2147 = vadd.f32 0.0, %v2146
        %2148 = vmatmul.f32.gmra.mxu0 %v2068
        %v2149 = vpop.f32.mrf.mxu0
        %v2150 = vadd.f32 0.0, %v2149
        %2151 = vdwg.mxu0
        %v2152 = vadd.f32 %v1732, %v2088
        %v2153 = vadd.f32 %v1773, %v2129
        %v2154 = vadd.f32 %v1735, %v2091
        %v2155 = vadd.f32 %v1776, %v2132
        %v2156 = vadd.f32 %v1738, %v2094
        %v2157 = vadd.f32 %v1779, %v2135
        %v2158 = vadd.f32 %v1741, %v2097
        %v2159 = vadd.f32 %v1782, %v2138
        %v2160 = vadd.f32 %v1744, %v2100
        %v2161 = vadd.f32 %v1785, %v2141
        %v2162 = vadd.f32 %v1747, %v2103
        %v2163 = vadd.f32 %v1788, %v2144
        %v2164 = vadd.f32 %v1750, %v2106
        %v2165 = vadd.f32 %v1791, %v2147
        %v2166 = vadd.f32 %v1753, %v2109
        %v2167 = vadd.f32 %v1794, %v2150
        %2168 = vrot.lane.b32.xlu0 %v665, 64
        %v2169 = vpop.permute.xlu0 %2168
        %2170 = vrot.lane.b32.xlu0 %v668, 64
        %v2171 = vpop.permute.xlu0 %2170
        %2172 = vrot.lane.b32.xlu0 %v671, 64
        %v2173 = vpop.permute.xlu0 %2172
        %2174 = vrot.lane.b32.xlu0 %v674, 64
        %v2175 = vpop.permute.xlu0 %2174
        %2176 = vrot.lane.b32.xlu0 %v677, 64
        %v2177 = vpop.permute.xlu0 %2176
        %2178 = vrot.lane.b32.xlu0 %v680, 64
        %v2179 = vpop.permute.xlu0 %2178
        %2180 = vrot.lane.b32.xlu0 %v683, 64
        %v2181 = vpop.permute.xlu0 %2180
        %2182 = vrot.lane.b32.xlu0 %v686, 64
        %v2183 = vpop.permute.xlu0 %2182
        %2184 = vrot.lane.b32.xlu0 %v829, 64
        %v2185 = vpop.permute.xlu0 %2184
        %2186 = vrot.lane.b32.xlu0 %v832, 64
        %v2187 = vpop.permute.xlu0 %2186
        %2188 = vrot.lane.b32.xlu0 %v835, 64
        %v2189 = vpop.permute.xlu0 %2188
        %2190 = vrot.lane.b32.xlu0 %v838, 64
        %v2191 = vpop.permute.xlu0 %2190
        %2192 = vrot.lane.b32.xlu0 %v841, 64
        %v2193 = vpop.permute.xlu0 %2192
        %2194 = vrot.lane.b32.xlu0 %v844, 64
        %v2195 = vpop.permute.xlu0 %2194
        %2196 = vrot.lane.b32.xlu0 %v847, 64
        %v2197 = vpop.permute.xlu0 %2196
        %2198 = vrot.lane.b32.xlu0 %v850, 64
        %v2199 = vpop.permute.xlu0 %2198
        %v2200 = vsel %vm1035, %v2169, 0
        %v2202 = vsel %vm1035, %v2171, 0
        %v2204 = vsel %vm1035, %v2173, 0
        %v2206 = vsel %vm1035, %v2175, 0
        %v2208 = vsel %vm1035, %v2177, 0
        %v2210 = vsel %vm1035, %v2179, 0
        %v2212 = vsel %vm1035, %v2181, 0
        %v2214 = vsel %vm1035, %v2183, 0
        %v2216 = vsel %vm1035, %v2185, 0
        %v2218 = vsel %vm1035, %v2187, 0
        %v2220 = vsel %vm1035, %v2189, 0
        %v2222 = vsel %vm1035, %v2191, 0
        %v2224 = vsel %vm1035, %v2193, 0
        %v2226 = vsel %vm1035, %v2195, 0
        %v2228 = vsel %vm1035, %v2197, 0
        %v2230 = vsel %vm1035, %v2199, 0
        %2232 = vmatpush.xpose.msra.mxu0 0.0
        %2233 = vmatpush.xpose.msra.mxu0 0.0
        %2234 = vmatpush.xpose.msra.mxu0 0.0
        %2235 = vmatpush.xpose.msra.mxu0 0.0
        %2236 = vmatpush.xpose.msra.mxu0 0.0
        %2237 = vmatpush.xpose.msra.mxu0 0.0
        %2238 = vmatpush.xpose.msra.mxu0 0.0
        %2239 = vmatpush.xpose.msra.mxu0 0.0
        %2240 = vmatpush.xpose.msra.mxu0 %v2230
        %2241 = vmatpush.xpose.msra.mxu0 %v2228
        %2242 = vmatpush.xpose.msra.mxu0 %v2226
        %2243 = vmatpush.xpose.msra.mxu0 %v2224
        %2244 = vmatpush.xpose.msra.mxu0 %v2222
        %2245 = vmatpush.xpose.msra.mxu0 %v2220
        %2246 = vmatpush.xpose.msra.mxu0 %v2218
        %2247 = vmatpush.xpose.msra.mxu0 %v2216
        %2248 = vmatmul.f32.gmra.mxu0 %v2200
        %v2249 = vpop.f32.mrf.mxu0
        %v2250 = vadd.f32 0.0, %v2249
        %2251 = vmatmul.f32.gmra.mxu0 %v2202
        %v2252 = vpop.f32.mrf.mxu0
        %v2253 = vadd.f32 0.0, %v2252
        %2254 = vmatmul.f32.gmra.mxu0 %v2204
        %v2255 = vpop.f32.mrf.mxu0
        %v2256 = vadd.f32 0.0, %v2255
        %2257 = vmatmul.f32.gmra.mxu0 %v2206
        %v2258 = vpop.f32.mrf.mxu0
        %v2259 = vadd.f32 0.0, %v2258
        %2260 = vmatmul.f32.gmra.mxu0 %v2208
        %v2261 = vpop.f32.mrf.mxu0
        %v2262 = vadd.f32 0.0, %v2261
        %2263 = vmatmul.f32.gmra.mxu0 %v2210
        %v2264 = vpop.f32.mrf.mxu0
        %v2265 = vadd.f32 0.0, %v2264
        %2266 = vmatmul.f32.gmra.mxu0 %v2212
        %v2267 = vpop.f32.mrf.mxu0
        %v2268 = vadd.f32 0.0, %v2267
        %2269 = vmatmul.f32.gmra.mxu0 %v2214
        %v2270 = vpop.f32.mrf.mxu0
        %v2271 = vadd.f32 0.0, %v2270
        %2272 = vdwg.mxu0
        %v2273 = vsel %vm1027, %v2250, -inf
        %v2274 = vsel %vm1028, %v2253, -inf
        %v2275 = vsel %vm1029, %v2256, -inf
        %v2276 = vsel %vm1030, %v2259, -inf
        %v2277 = vsel %vm1031, %v2262, -inf
        %v2278 = vsel %vm1032, %v2265, -inf
        %v2279 = vsel %vm1033, %v2268, -inf
        %v2280 = vsel %vm1034, %v2271, -inf
        %v2281 = vsel %vm1035, %v2273, -inf
        %2282 = vmax.xlane.f32.xlu0 %v2281
        %v2283 = vpop.xlane.xlu0 %2282
        %v2284 = vsel %vm1035, %v2274, -inf
        %2285 = vmax.xlane.f32.xlu0 %v2284
        %v2286 = vpop.xlane.xlu0 %2285
        %v2287 = vsel %vm1035, %v2275, -inf
        %2288 = vmax.xlane.f32.xlu0 %v2287
        %v2289 = vpop.xlane.xlu0 %2288
        %v2290 = vsel %vm1035, %v2276, -inf
        %2291 = vmax.xlane.f32.xlu0 %v2290
        %v2292 = vpop.xlane.xlu0 %2291
        %v2293 = vsel %vm1035, %v2277, -inf
        %2294 = vmax.xlane.f32.xlu0 %v2293
        %v2295 = vpop.xlane.xlu0 %2294
        %v2296 = vsel %vm1035, %v2278, -inf
        %2297 = vmax.xlane.f32.xlu0 %v2296
        %v2298 = vpop.xlane.xlu0 %2297
        %v2299 = vsel %vm1035, %v2279, -inf
        %2300 = vmax.xlane.f32.xlu0 %v2299
        %v2301 = vpop.xlane.xlu0 %2300
        %v2302 = vsel %vm1035, %v2280, -inf
        %2303 = vmax.xlane.f32.xlu0 %v2302
        %v2304 = vpop.xlane.xlu0 %2303
        %v2305 = vsub.f32 %v2273, %v2283
        %v2306 = vsub.f32 %v2274, %v2286
        %v2307 = vsub.f32 %v2275, %v2289
        %v2308 = vsub.f32 %v2276, %v2292
        %v2309 = vsub.f32 %v2277, %v2295
        %v2310 = vsub.f32 %v2278, %v2298
        %v2311 = vsub.f32 %v2279, %v2301
        %v2312 = vsub.f32 %v2280, %v2304
        %v2313 = vmul.f32 %v2305, 1.442695
        %v2314 = vpow.pop %v2313
        %v2315 = vmul.f32 %v2306, 1.442695
        %v2316 = vpow.pop %v2315
        %v2317 = vmul.f32 %v2307, 1.442695
        %v2318 = vpow.pop %v2317
        %v2319 = vmul.f32 %v2308, 1.442695
        %v2320 = vpow.pop %v2319
        %v2321 = vmul.f32 %v2309, 1.442695
        %v2322 = vpow.pop %v2321
        %v2323 = vmul.f32 %v2310, 1.442695
        %v2324 = vpow.pop %v2323
        %v2325 = vmul.f32 %v2311, 1.442695
        %v2326 = vpow.pop %v2325
        %v2327 = vmul.f32 %v2312, 1.442695
        %v2328 = vpow.pop %v2327
        %v2329 = vsel %vm1035, %v2314, 0.0
        %2330 = vadd.xlane.f32.xlu0 %v2329
        %v2331 = vpop.xlane.xlu0 %2330
        %v2332 = vsel %vm1035, %v2316, 0.0
        %2333 = vadd.xlane.f32.xlu0 %v2332
        %v2334 = vpop.xlane.xlu0 %2333
        %v2335 = vsel %vm1035, %v2318, 0.0
        %2336 = vadd.xlane.f32.xlu0 %v2335
        %v2337 = vpop.xlane.xlu0 %2336
        %v2338 = vsel %vm1035, %v2320, 0.0
        %2339 = vadd.xlane.f32.xlu0 %v2338
        %v2340 = vpop.xlane.xlu0 %2339
        %v2341 = vsel %vm1035, %v2322, 0.0
        %2342 = vadd.xlane.f32.xlu0 %v2341
        %v2343 = vpop.xlane.xlu0 %2342
        %v2344 = vsel %vm1035, %v2324, 0.0
        %2345 = vadd.xlane.f32.xlu0 %v2344
        %v2346 = vpop.xlane.xlu0 %2345
        %v2347 = vsel %vm1035, %v2326, 0.0
        %2348 = vadd.xlane.f32.xlu0 %v2347
        %v2349 = vpop.xlane.xlu0 %2348
        %v2350 = vsel %vm1035, %v2328, 0.0
        %2351 = vadd.xlane.f32.xlu0 %v2350
        %v2352 = vpop.xlane.xlu0 %2351
        %v2353 = vrcp.pop %v2331
        %v2354 = vrcp.pop %v2334
        %v2355 = vrcp.pop %v2337
        %v2356 = vrcp.pop %v2340
        %v2357 = vrcp.pop %v2343
        %v2358 = vrcp.pop %v2346
        %v2359 = vrcp.pop %v2349
        %v2360 = vrcp.pop %v2352
        %v2361 = vmul.f32 %v2314, %v2353
        %v2362 = vmul.f32 %v2316, %v2354
        %v2363 = vmul.f32 %v2318, %v2355
        %v2364 = vmul.f32 %v2320, %v2356
        %v2365 = vmul.f32 %v2322, %v2357
        %v2366 = vmul.f32 %v2324, %v2358
        %v2367 = vmul.f32 %v2326, %v2359
        %v2368 = vmul.f32 %v2328, %v2360
        %2377 = vrot.lane.b32.xlu0 %v993, 64
        %v2378 = vpop.permute.xlu0 %2377
        %2379 = vrot.lane.b32.xlu0 %v996, 64
        %v2380 = vpop.permute.xlu0 %2379
        %2381 = vrot.lane.b32.xlu0 %v999, 64
        %v2382 = vpop.permute.xlu0 %2381
        %2383 = vrot.lane.b32.xlu0 %v1002, 64
        %v2384 = vpop.permute.xlu0 %2383
        %2385 = vrot.lane.b32.xlu0 %v1005, 64
        %v2386 = vpop.permute.xlu0 %2385
        %2387 = vrot.lane.b32.xlu0 %v1008, 64
        %v2388 = vpop.permute.xlu0 %2387
        %2389 = vrot.lane.b32.xlu0 %v1011, 64
        %v2390 = vpop.permute.xlu0 %2389
        %2391 = vrot.lane.b32.xlu0 %v1014, 64
        %v2392 = vpop.permute.xlu0 %2391
        %v2402 = vsel %vm1035, %v2361, 0
        %v2405 = vsel %vm1035, %v2362, 0
        %v2408 = vsel %vm1035, %v2363, 0
        %v2411 = vsel %vm1035, %v2364, 0
        %v2414 = vsel %vm1035, %v2365, 0
        %v2417 = vsel %vm1035, %v2366, 0
        %v2420 = vsel %vm1035, %v2367, 0
        %v2423 = vsel %vm1035, %v2368, 0
        %2425 = vmatpush.msra.mxu0 0.0
        %2426 = vmatpush.msra.mxu0 0.0
        %2427 = vmatpush.msra.mxu0 0.0
        %2428 = vmatpush.msra.mxu0 0.0
        %2429 = vmatpush.msra.mxu0 0.0
        %2430 = vmatpush.msra.mxu0 0.0
        %2431 = vmatpush.msra.mxu0 0.0
        %2432 = vmatpush.msra.mxu0 0.0
        %2433 = vmatpush.msra.mxu0 %v2392
        %2434 = vmatpush.msra.mxu0 %v2390
        %2435 = vmatpush.msra.mxu0 %v2388
        %2436 = vmatpush.msra.mxu0 %v2386
        %2437 = vmatpush.msra.mxu0 %v2384
        %2438 = vmatpush.msra.mxu0 %v2382
        %2439 = vmatpush.msra.mxu0 %v2380
        %2440 = vmatpush.msra.mxu0 %v2378
        %2441 = vmatmul.f32.gmra.mxu0 %v2402
        %v2442 = vpop.f32.mrf.mxu0
        %v2443 = vadd.f32 0.0, %v2442
        %2444 = vmatmul.f32.gmra.mxu0 %v2405
        %v2445 = vpop.f32.mrf.mxu0
        %v2446 = vadd.f32 0.0, %v2445
        %2447 = vmatmul.f32.gmra.mxu0 %v2408
        %v2448 = vpop.f32.mrf.mxu0
        %v2449 = vadd.f32 0.0, %v2448
        %2450 = vmatmul.f32.gmra.mxu0 %v2411
        %v2451 = vpop.f32.mrf.mxu0
        %v2452 = vadd.f32 0.0, %v2451
        %2453 = vmatmul.f32.gmra.mxu0 %v2414
        %v2454 = vpop.f32.mrf.mxu0
        %v2455 = vadd.f32 0.0, %v2454
        %2456 = vmatmul.f32.gmra.mxu0 %v2417
        %v2457 = vpop.f32.mrf.mxu0
        %v2458 = vadd.f32 0.0, %v2457
        %2459 = vmatmul.f32.gmra.mxu0 %v2420
        %v2460 = vpop.f32.mrf.mxu0
        %v2461 = vadd.f32 0.0, %v2460
        %2462 = vmatmul.f32.gmra.mxu0 %v2423
        %v2463 = vpop.f32.mrf.mxu0
        %v2464 = vadd.f32 0.0, %v2463
        %2465 = vdwg.mxu0
        %v2467 = vsel %vm1035, %v2443, 0
        %v2470 = vsel %vm1035, %v2446, 0
        %v2473 = vsel %vm1035, %v2449, 0
        %v2476 = vsel %vm1035, %v2452, 0
        %v2479 = vsel %vm1035, %v2455, 0
        %v2482 = vsel %vm1035, %v2458, 0
        %v2485 = vsel %vm1035, %v2461, 0
        %v2488 = vsel %vm1035, %v2464, 0
        %2490 = vmatpush.msra.mxu0 0.0
        %2491 = vmatpush.msra.mxu0 0.0
        %2492 = vmatpush.msra.mxu0 0.0
        %2493 = vmatpush.msra.mxu0 0.0
        %2494 = vmatpush.msra.mxu0 0.0
        %2495 = vmatpush.msra.mxu0 0.0
        %2496 = vmatpush.msra.mxu0 0.0
        %2497 = vmatpush.msra.mxu0 0.0
        %2498 = vmatpush.msra.mxu0 %v521
        %2499 = vmatpush.msra.mxu0 %v519
        %2500 = vmatpush.msra.mxu0 %v517
        %2501 = vmatpush.msra.mxu0 %v515
        %2502 = vmatpush.msra.mxu0 %v513
        %2503 = vmatpush.msra.mxu0 %v511
        %2504 = vmatpush.msra.mxu0 %v509
        %2505 = vmatpush.msra.mxu0 %v507
        %2506 = vmatmul.f32.gmra.mxu0 %v2467
        %v2507 = vpop.f32.mrf.mxu0
        %v2508 = vadd.f32 0.0, %v2507
        %2509 = vmatmul.f32.gmra.mxu0 %v2470
        %v2510 = vpop.f32.mrf.mxu0
        %v2511 = vadd.f32 0.0, %v2510
        %2512 = vmatmul.f32.gmra.mxu0 %v2473
        %v2513 = vpop.f32.mrf.mxu0
        %v2514 = vadd.f32 0.0, %v2513
        %2515 = vmatmul.f32.gmra.mxu0 %v2476
        %v2516 = vpop.f32.mrf.mxu0
        %v2517 = vadd.f32 0.0, %v2516
        %2518 = vmatmul.f32.gmra.mxu0 %v2479
        %v2519 = vpop.f32.mrf.mxu0
        %v2520 = vadd.f32 0.0, %v2519
        %2521 = vmatmul.f32.gmra.mxu0 %v2482
        %v2522 = vpop.f32.mrf.mxu0
        %v2523 = vadd.f32 0.0, %v2522
        %2524 = vmatmul.f32.gmra.mxu0 %v2485
        %v2525 = vpop.f32.mrf.mxu0
        %v2526 = vadd.f32 0.0, %v2525
        %2527 = vmatmul.f32.gmra.mxu0 %v2488
        %v2528 = vpop.f32.mrf.mxu0
        %v2529 = vadd.f32 0.0, %v2528
        %2530 = vdwg.mxu0
        %2531 = vmatpush.msra.mxu0 0.0
        %2532 = vmatpush.msra.mxu0 0.0
        %2533 = vmatpush.msra.mxu0 0.0
        %2534 = vmatpush.msra.mxu0 0.0
        %2535 = vmatpush.msra.mxu0 0.0
        %2536 = vmatpush.msra.mxu0 0.0
        %2537 = vmatpush.msra.mxu0 0.0
        %2538 = vmatpush.msra.mxu0 0.0
        %2539 = vmatpush.msra.mxu0 %v522
        %2540 = vmatpush.msra.mxu0 %v520
        %2541 = vmatpush.msra.mxu0 %v518
        %2542 = vmatpush.msra.mxu0 %v516
        %2543 = vmatpush.msra.mxu0 %v514
        %2544 = vmatpush.msra.mxu0 %v512
        %2545 = vmatpush.msra.mxu0 %v510
        %2546 = vmatpush.msra.mxu0 %v508
        %2547 = vmatmul.f32.gmra.mxu0 %v2467
        %v2548 = vpop.f32.mrf.mxu0
        %v2549 = vadd.f32 0.0, %v2548
        %2550 = vmatmul.f32.gmra.mxu0 %v2470
        %v2551 = vpop.f32.mrf.mxu0
        %v2552 = vadd.f32 0.0, %v2551
        %2553 = vmatmul.f32.gmra.mxu0 %v2473
        %v2554 = vpop.f32.mrf.mxu0
        %v2555 = vadd.f32 0.0, %v2554
        %2556 = vmatmul.f32.gmra.mxu0 %v2476
        %v2557 = vpop.f32.mrf.mxu0
        %v2558 = vadd.f32 0.0, %v2557
        %2559 = vmatmul.f32.gmra.mxu0 %v2479
        %v2560 = vpop.f32.mrf.mxu0
        %v2561 = vadd.f32 0.0, %v2560
        %2562 = vmatmul.f32.gmra.mxu0 %v2482
        %v2563 = vpop.f32.mrf.mxu0
        %v2564 = vadd.f32 0.0, %v2563
        %2565 = vmatmul.f32.gmra.mxu0 %v2485
        %v2566 = vpop.f32.mrf.mxu0
        %v2567 = vadd.f32 0.0, %v2566
        %2568 = vmatmul.f32.gmra.mxu0 %v2488
        %v2569 = vpop.f32.mrf.mxu0
        %v2570 = vadd.f32 0.0, %v2569
        %2571 = vdwg.mxu0
        %v2572 = vadd.f32 %v2152, %v2508
        %v2573 = vadd.f32 %v2153, %v2549
        %v2574 = vadd.f32 %v2154, %v2511
        %v2575 = vadd.f32 %v2155, %v2552
        %v2576 = vadd.f32 %v2156, %v2514
        %v2577 = vadd.f32 %v2157, %v2555
        %v2578 = vadd.f32 %v2158, %v2517
        %v2579 = vadd.f32 %v2159, %v2558
        %v2580 = vadd.f32 %v2160, %v2520
        %v2581 = vadd.f32 %v2161, %v2561
        %v2582 = vadd.f32 %v2162, %v2523
        %v2583 = vadd.f32 %v2163, %v2564
        %v2584 = vadd.f32 %v2164, %v2526
        %v2585 = vadd.f32 %v2165, %v2567
        %v2586 = vadd.f32 %v2166, %v2529
        %v2587 = vadd.f32 %v2167, %v2570
        %v2589 = vperm.slane %v523, 0
        %v2590 = vperm.slane %v523, 1
        %v2593 = vadd.f32 %v2572, %v2589
        %v2594 = vadd.f32 %v2573, %v2590
        %v2595 = vadd.f32 %v2574, %v2589
        %v2596 = vadd.f32 %v2575, %v2590
        %v2597 = vadd.f32 %v2576, %v2589
        %v2598 = vadd.f32 %v2577, %v2590
        %v2599 = vadd.f32 %v2578, %v2589
        %v2600 = vadd.f32 %v2579, %v2590
        %v2601 = vadd.f32 %v2580, %v2589
        %v2602 = vadd.f32 %v2581, %v2590
        %v2603 = vadd.f32 %v2582, %v2589
        %v2604 = vadd.f32 %v2583, %v2590
        %v2605 = vadd.f32 %v2584, %v2589
        %v2606 = vadd.f32 %v2585, %v2590
        %v2607 = vadd.f32 %v2586, %v2589
        %v2608 = vadd.f32 %v2587, %v2590
        %2609 = vst [vmem:[%s250] sm:$0xff] %v2593
        %2610 = vst [vmem:[%s250 + $0x8] sm:$0xff] %v2594
        %2611 = vst [vmem:[%s250 + $0x10] sm:$0xff] %v2595
        %2612 = vst [vmem:[%s250 + $0x18] sm:$0xff] %v2596
        %2613 = vst [vmem:[%s250 + $0x20] sm:$0xff] %v2597
        %2614 = vst [vmem:[%s250 + $0x28] sm:$0xff] %v2598
        %2615 = vst [vmem:[%s250 + $0x30] sm:$0xff] %v2599
        %2616 = vst [vmem:[%s250 + $0x38] sm:$0xff] %v2600
        %2617 = vst [vmem:[%s250 + $0x40] sm:$0xff] %v2601
        %2618 = vst [vmem:[%s250 + $0x48] sm:$0xff] %v2602
        %2619 = vst [vmem:[%s250 + $0x50] sm:$0xff] %v2603
        %2620 = vst [vmem:[%s250 + $0x58] sm:$0xff] %v2604
        %2621 = vst [vmem:[%s250 + $0x60] sm:$0xff] %v2605
        %2622 = vst [vmem:[%s250 + $0x68] sm:$0xff] %v2606
        %2623 = vst [vmem:[%s250 + $0x70] sm:$0xff] %v2607
        %2624 = vst [vmem:[%s250 + $0x78] sm:$0xff] %v2608
        %s2625 = sand.u32 %s119, 1
        %s2626 = scalar_lea.sflag [#allocation4], %s2625
        %s2627 = sand.u32 %s119, 1
        %s2628 = smul.addr %s2627, 128
        %s2629 = scalar_lea.vmem [#allocation8], %s2628
        // Predicated region
        $region49: #{tpu_custom_call.1} parent=35 // pred_check
          %p2630 = pneg %p129
        $region50: #{tpu_custom_call.1} parent=35 // pred_check_branch
          %2632 = sbr.rel (%p2630) target = $region52
        $region51: #{tpu_custom_call.1} parent=35 // pred_region
          %2634 = vsyncadd %s2626, 0
          %s2635 = smul.addr %s22, 16
          %s2636 = smul.addr %s2635, 8
          %s2637 = scalar_lea.hbm %s4, %s2636
          %s2638 = sshll.u32 %s2629, 4
          %s2639 = int_to_ptr.vmem [resolvable:$true] %s2638
          %s2640 = sshll.u32 %s2637, 4
          %s2641 = int_to_ptr.hbm [resolvable:$true] %s2640
          %2646 = dma.vmem_to_hbm [thread:$0]  %s2639, 2048, %s2641, %s2626, 256, 256, 16
        $region52: #{tpu_custom_call.1} parent=35 // pred_fallthru
          _
      $region36: #{tpu_custom_call.1} parent=5 // pred_fallthru
        _
      %p2647 = scmp.le.s32.totalorder 2, %s17
      // Predicated region
      $region53: #{tpu_custom_call.1} parent=5 // pred_check
        %p2648 = pneg %p2647
      $region54: #{tpu_custom_call.1} parent=5 // pred_check_branch
        %2650 = sbr.rel (%p2648) target = $region56
      $region55: #{tpu_custom_call.1} parent=5 // pred_region
        %s2651 = ssub.s32 %s17, 2
        // Predicated region
        $region57: #{tpu_custom_call.1} parent=55 // pred_check
          %p2652 = pneg %p135
        $region58: #{tpu_custom_call.1} parent=55 // pred_check_branch
          %2654 = sbr.rel (%p2652) target = $region60
        $region59: #{tpu_custom_call.1} parent=55 // pred_region
          %s2655 = sand.u32 %s120, 1
          %s2656 = scalar_lea.sflag [#allocation4], %s2655
          %s2657 = sand.u32 %s120, 1
          %s2658 = smul.addr %s2657, 128
          %s2659 = scalar_lea.vmem [#allocation8], %s2658
          %2661 = dma.done %s2656, 2048
        $region60: #{tpu_custom_call.1} parent=55 // pred_fallthru
          _
      $region56: #{tpu_custom_call.1} parent=5 // pred_fallthru
        _
    $region6: #{tpu_custom_call.1} parent=1 // loop_footer
      %s21 = sadd.s32 1, %s17
    $region7: #{tpu_custom_call.1} parent=1 // loop_footer_branch
      %16 = sbr.rel target = $region3
    $region8: #{tpu_custom_call.1} parent=1 // loop_exit
      _
    %2662 = vsyncpa [#allocation3], 1
    %s2663 = scalar_lea.sflag [#allocation3], 1
    %2664 = vsyncpa %s2663, 1
    %2665 = vsyncpa [#allocation6], 1
    %2666 = vsyncpa [#allocation4], 1
    %s2667 = scalar_lea.sflag [#allocation4], 1
    %2668 = vsyncpa %s2667, 1

</llo_original>
